<compile_context>
chip_gen: v7x
topology: tpu7x:2x2x1
jax: 0.10.0
libtpu: 0.0.40
codegen_flags: <defaults>
</compile_context>

<pallas_src>
import jax
import jax.numpy as jnp
import numpy as np
from jax.experimental import pallas as pl
from jax.experimental.pallas import tpu as pltpu

_SELU_ALPHA = 1.6732632423543772
_SELU_SCALE = 1.0507009873554805


def _selu(x):
    # scale * (x if x > 0 else alpha * (exp(x) - 1)); exp argument is clamped
    # so the not-taken branch never overflows.
    return _SELU_SCALE * jnp.where(
        x > 0.0, x, _SELU_ALPHA * (jnp.exp(jnp.minimum(x, 0.0)) - 1.0))


def _locnet_kernel(xcol_ref, w1_ref, b1_ref, w2_ref, b2_ref, avg_ref, o_ref):
    # xcol_ref : (1, S1, KW)   im2col of one sample (S1 = H*Wout rows, KW taps)
    # w1_ref   : (KW, C1)      conv1 weight (transposed)
    # b1_ref   : (1, C1)
    # w2_ref   : (C1, C2)      1x1 conv weight (transposed)
    # b2_ref   : (1, C2)
    # avg_ref  : (Wout, S1)    average-over-H matrix (rows sum to 1)
    # o_ref    : (1, Wout, C2) pooled features, lane-dense (C2 = 128 lanes)
    xcol = xcol_ref[0]                                    # (S1, KW)
    w1 = w1_ref[...]                                      # (KW, C1)

    # conv1: kernel (1,3) with a single input channel -> 3 broadcast FMAs on
    # the VPU (a K=3 MXU matmul would be nearly all overhead; VPU slot is idle).
    y1 = xcol[:, 0:1] * w1[0:1, :]
    for d in range(1, xcol.shape[1]):                     # KW is static (3)
        y1 = y1 + xcol[:, d:d + 1] * w1[d:d + 1, :]
    y1 = _selu(y1 + b1_ref[...])                          # (S1, C1)

    # conv2: 1x1 conv == plain channel matmul on the MXU.
    y2 = jnp.dot(y1, w2_ref[...], preferred_element_type=jnp.float32)
    y2 = _selu(y2 + b2_ref[...])                          # (S1, C2)

    # AvgPool2d((window_size, 1)) over the H axis as one MXU matmul:
    # pooled[w, c] = (1/H) * sum_h y2[h*Wout + w, c]
    pooled = jnp.dot(avg_ref[...], y2, preferred_element_type=jnp.float32)
    o_ref[0] = pooled.astype(o_ref.dtype)                 # (Wout, C2)


def localization_net_avgpool(x, w1, b1, w2, b2, *, window_size):
    """Forward pass of LocalizationNetAvgPool.

    x  : (B, 1, H, W) float32 with H == window_size
    w1 : (C1, 1, 1, KW) conv1 weight,  b1 : (C1,)
    w2 : (C2, C1, 1, 1) conv2 weight,  b2 : (C2,)
    returns (B, C2 * (W - KW + 1)) flattened exactly like the torch module.
    """
    B, c_in, H, W = x.shape
    assert c_in == 1
    # TODO(synk): only the H == window_size case of AvgPool2d((window_size, 1))
    # is implemented (the module's intended use); H > window_size would need an
    # extra pooled-row axis.
    assert H == window_size, "kernel assumes the pool collapses the full H axis"
    C1, _, KH, KW = w1.shape
    C2 = w2.shape[0]
    assert KH == 1 and w2.shape[2:] == (1, 1)
    Wout = W - KW + 1
    S1 = H * Wout

    dtype = jnp.float32
    x = x.astype(dtype)

    # ---- wrapper-side layout plumbing (no compute hoisted) -------------------
    # im2col for the (1, KW) conv: rows ordered r = h*Wout + w, taps in lanes.
    planes = [x[:, 0, :, d:d + Wout] for d in range(KW)]          # KW x (B,H,Wout)
    xcol = jnp.stack(planes, axis=-1).reshape(B, S1, KW)          # (B, S1, KW)
    # Weights in matmul orientation.
    w1t = jnp.transpose(w1[:, 0, 0, :]).astype(dtype)             # (KW, C1)
    w2t = jnp.transpose(w2[:, :, 0, 0]).astype(dtype)             # (C1, C2)
    b1r = b1.reshape(1, C1).astype(dtype)
    b2r = b2.reshape(1, C2).astype(dtype)
    # Averaging matrix: avg[w, h*Wout + w'] = 1/H if w' == w else 0.
    r = jnp.arange(S1, dtype=jnp.int32)[None, :]
    wi = jnp.arange(Wout, dtype=jnp.int32)[:, None]
    avg = ((r % Wout) == wi).astype(dtype) / float(H)             # (Wout, S1)

    def const_spec(shape):
        return pl.BlockSpec(shape, lambda b: (0, 0))

    pooled = pl.pallas_call(
        _locnet_kernel,
        out_shape=jax.ShapeDtypeStruct((B, Wout, C2), dtype),
        grid_spec=pltpu.PrefetchScalarGridSpec(
            num_scalar_prefetch=0,
            grid=(B,),
            in_specs=[
                pl.BlockSpec((1, S1, KW), lambda b: (b, 0, 0)),
                const_spec((KW, C1)),
                const_spec((1, C1)),
                const_spec((C1, C2)),
                const_spec((1, C2)),
                const_spec((Wout, S1)),
            ],
            out_specs=pl.BlockSpec((1, Wout, C2), lambda b: (b, 0, 0)),
        ),
        compiler_params=pltpu.CompilerParams(
            dimension_semantics=("parallel",)),
    )(xcol, w1t, b1r, w2t, b2r, avg)                               # (B, Wout, C2)

    # torch Flatten of (B, C2, 1, Wout): out[b, c*Wout + w].
    return jnp.transpose(pooled, (0, 2, 1)).reshape(B, C2 * Wout)


def localization_net_avgpool_ref(x, w1, b1, w2, b2, *, window_size):
    """Pure-JAX reference mirroring the torch module."""
    B, _, H, W = x.shape
    KW = w1.shape[-1]
    Wout = W - KW + 1
    cols = jnp.stack([x[:, 0, :, d:d + Wout] for d in range(KW)], axis=-1)
    y1 = jnp.einsum('bhwd,cd->bhwc', cols, w1[:, 0, 0, :],
                    precision=jax.lax.Precision.HIGHEST) + b1
    y1 = jax.nn.selu(y1)
    y2 = jnp.einsum('bhwc,oc->bhwo', y1, w2[:, :, 0, 0],
                    precision=jax.lax.Precision.HIGHEST) + b2
    y2 = jax.nn.selu(y2)
    pooled = jnp.mean(y2, axis=1)                                  # (B, Wout, C2)
    return jnp.transpose(pooled, (0, 2, 1)).reshape(B, -1)


if __name__ == "__main__":
    key = jax.random.PRNGKey(0)
    kx, k1, k2, k3, k4 = jax.random.split(key, 5)

    # Small shapes consistent with the module: window_size = H = 16, W = 16.
    B, H, W = 2, 16, 16
    C1, C2, KW = 64, 128, 3
    window_size = H

    x = jax.random.normal(kx, (B, 1, H, W), dtype=jnp.float32)
    # PyTorch default Conv2d init: U(-1/sqrt(fan_in), 1/sqrt(fan_in)).
    lim1 = 1.0 / np.sqrt(1 * 1 * KW)
    w1 = jax.random.uniform(k1, (C1, 1, 1, KW), jnp.float32, -lim1, lim1)
    b1 = jax.random.uniform(k2, (C1,), jnp.float32, -lim1, lim1)
    lim2 = 1.0 / np.sqrt(C1 * 1 * 1)
    w2 = jax.random.uniform(k3, (C2, C1, 1, 1), jnp.float32, -lim2, lim2)
    b2 = jax.random.uniform(k4, (C2,), jnp.float32, -lim2, lim2)

    out = localization_net_avgpool(x, w1, b1, w2, b2, window_size=window_size)
    out = jax.block_until_ready(out)

    ref = localization_net_avgpool_ref(x, w1, b1, w2, b2,
                                       window_size=window_size)
    np.testing.assert_allclose(np.asarray(out), np.asarray(ref),
                               rtol=5e-3, atol=5e-3)
    assert out.shape == (B, C2 * (W - KW + 1))
    print("KERNEL_OK")
</pallas_src>

<mosaic_0001>
module attributes {stable_mosaic.version = 11 : i64} {
  func.func @_locnet_kernel(%arg0: i32, %arg1: memref<1x224x3xf32, #tpu.memory_space<vmem>>, %arg2: memref<3x64xf32, #tpu.memory_space<vmem>>, %arg3: memref<1x64xf32, #tpu.memory_space<vmem>>, %arg4: memref<64x128xf32, #tpu.memory_space<vmem>>, %arg5: memref<1x128xf32, #tpu.memory_space<vmem>>, %arg6: memref<14x224xf32, #tpu.memory_space<vmem>>, %arg7: memref<1x14x128xf32, #tpu.memory_space<vmem>>) attributes {dimension_semantics = [#tpu.dimension_semantics<parallel>], iteration_bounds = array<i64: 2>, scalar_prefetch = 0 : i64, scratch_operands = 0 : i64, tpu.core_type = #tpu.core_type<tc>, window_params = [{transform_indices = @transform_0, window_bounds = array<i64: 1, 224, 3>}, {pipeline_mode = #tpu.pipeline_mode<synchronous>, transform_indices = @transform_1, window_bounds = array<i64: 3, 64>}, {pipeline_mode = #tpu.pipeline_mode<synchronous>, transform_indices = @transform_2, window_bounds = array<i64: 1, 64>}, {pipeline_mode = #tpu.pipeline_mode<synchronous>, transform_indices = @transform_3, window_bounds = array<i64: 64, 128>}, {pipeline_mode = #tpu.pipeline_mode<synchronous>, transform_indices = @transform_4, window_bounds = array<i64: 1, 128>}, {pipeline_mode = #tpu.pipeline_mode<synchronous>, transform_indices = @transform_5, window_bounds = array<i64: 14, 224>}, {transform_indices = @transform_6, window_bounds = array<i64: 1, 14, 128>}]} {
    %c0 = arith.constant 0 : index
    %c0_0 = arith.constant 0 : index
    %c0_1 = arith.constant 0 : index
    %0 = vector.load %arg1[%c0, %c0_0, %c0_1] : memref<1x224x3xf32, #tpu.memory_space<vmem>>, vector<1x224x3xf32>
    %1 = vector.shape_cast %0 : vector<1x224x3xf32> to vector<224x3xf32>
    %c0_2 = arith.constant 0 : index
    %c0_3 = arith.constant 0 : index
    %2 = vector.load %arg2[%c0_2, %c0_3] : memref<3x64xf32, #tpu.memory_space<vmem>>, vector<3x64xf32>
    %3 = vector.extract_strided_slice %1 {offsets = [0, 0], sizes = [224, 1], strides = [1, 1]} : vector<224x3xf32> to vector<224x1xf32>
    %4 = vector.extract_strided_slice %2 {offsets = [0, 0], sizes = [1, 64], strides = [1, 1]} : vector<3x64xf32> to vector<1x64xf32>
    %5 = vector.broadcast %3 : vector<224x1xf32> to vector<224x64xf32>
    %6 = vector.broadcast %4 : vector<1x64xf32> to vector<224x64xf32>
    %7 = arith.mulf %5, %6 : vector<224x64xf32>
    %8 = vector.extract_strided_slice %1 {offsets = [0, 1], sizes = [224, 1], strides = [1, 1]} : vector<224x3xf32> to vector<224x1xf32>
    %9 = vector.extract_strided_slice %2 {offsets = [1, 0], sizes = [1, 64], strides = [1, 1]} : vector<3x64xf32> to vector<1x64xf32>
    %10 = vector.broadcast %8 : vector<224x1xf32> to vector<224x64xf32>
    %11 = vector.broadcast %9 : vector<1x64xf32> to vector<224x64xf32>
    %12 = arith.mulf %10, %11 : vector<224x64xf32>
    %13 = arith.addf %7, %12 : vector<224x64xf32>
    %14 = vector.extract_strided_slice %1 {offsets = [0, 2], sizes = [224, 1], strides = [1, 1]} : vector<224x3xf32> to vector<224x1xf32>
    %15 = vector.extract_strided_slice %2 {offsets = [2, 0], sizes = [1, 64], strides = [1, 1]} : vector<3x64xf32> to vector<1x64xf32>
    %16 = vector.broadcast %14 : vector<224x1xf32> to vector<224x64xf32>
    %17 = vector.broadcast %15 : vector<1x64xf32> to vector<224x64xf32>
    %18 = arith.mulf %16, %17 : vector<224x64xf32>
    %19 = arith.addf %13, %18 : vector<224x64xf32>
    %c0_4 = arith.constant 0 : index
    %c0_5 = arith.constant 0 : index
    %20 = vector.load %arg3[%c0_4, %c0_5] : memref<1x64xf32, #tpu.memory_space<vmem>>, vector<1x64xf32>
    %21 = vector.broadcast %20 : vector<1x64xf32> to vector<224x64xf32>
    %22 = arith.addf %19, %21 : vector<224x64xf32>
    %cst = arith.constant 0.000000e+00 : f32
    %23 = vector.broadcast %cst : f32 to vector<224x64xf32>
    %24 = arith.cmpf ogt, %22, %23 : vector<224x64xf32>
    %cst_6 = arith.constant 0.000000e+00 : f32
    %25 = vector.broadcast %cst_6 : f32 to vector<224x64xf32>
    %26 = arith.minimumf %22, %25 : vector<224x64xf32>
    %27 = math.exp %26 : vector<224x64xf32>
    %cst_7 = arith.constant 1.000000e+00 : f32
    %28 = vector.broadcast %cst_7 : f32 to vector<224x64xf32>
    %29 = arith.subf %27, %28 : vector<224x64xf32>
    %cst_8 = arith.constant 1.67326319 : f32
    %30 = vector.broadcast %cst_8 : f32 to vector<224x64xf32>
    %31 = arith.mulf %30, %29 : vector<224x64xf32>
    %32 = arith.select %24, %22, %31 : vector<224x64xi1>, vector<224x64xf32>
    %cst_9 = arith.constant 1.05070102 : f32
    %33 = vector.broadcast %cst_9 : f32 to vector<224x64xf32>
    %34 = arith.mulf %33, %32 : vector<224x64xf32>
    %c0_10 = arith.constant 0 : index
    %c0_11 = arith.constant 0 : index
    %35 = vector.load %arg4[%c0_10, %c0_11] : memref<64x128xf32, #tpu.memory_space<vmem>>, vector<64x128xf32>
    %cst_12 = arith.constant dense<0.000000e+00> : vector<224x128xf32>
    %36 = tpu.matmul %34, %35, %cst_12 {dimension_numbers = #tpu.dot_dimension_numbers<[1], [0], [0], [1], [0, 0, 1, 1], [], []>} : vector<224x64xf32>, vector<64x128xf32>, vector<224x128xf32> -> vector<224x128xf32>
    %c0_13 = arith.constant 0 : index
    %c0_14 = arith.constant 0 : index
    %37 = vector.load %arg5[%c0_13, %c0_14] : memref<1x128xf32, #tpu.memory_space<vmem>>, vector<1x128xf32>
    %38 = vector.broadcast %37 : vector<1x128xf32> to vector<224x128xf32>
    %39 = arith.addf %36, %38 : vector<224x128xf32>
    %cst_15 = arith.constant 0.000000e+00 : f32
    %40 = vector.broadcast %cst_15 : f32 to vector<224x128xf32>
    %41 = arith.cmpf ogt, %39, %40 : vector<224x128xf32>
    %cst_16 = arith.constant 0.000000e+00 : f32
    %42 = vector.broadcast %cst_16 : f32 to vector<224x128xf32>
    %43 = arith.minimumf %39, %42 : vector<224x128xf32>
    %44 = math.exp %43 : vector<224x128xf32>
    %cst_17 = arith.constant 1.000000e+00 : f32
    %45 = vector.broadcast %cst_17 : f32 to vector<224x128xf32>
    %46 = arith.subf %44, %45 : vector<224x128xf32>
    %cst_18 = arith.constant 1.67326319 : f32
    %47 = vector.broadcast %cst_18 : f32 to vector<224x128xf32>
    %48 = arith.mulf %47, %46 : vector<224x128xf32>
    %49 = arith.select %41, %39, %48 : vector<224x128xi1>, vector<224x128xf32>
    %cst_19 = arith.constant 1.05070102 : f32
    %50 = vector.broadcast %cst_19 : f32 to vector<224x128xf32>
    %51 = arith.mulf %50, %49 : vector<224x128xf32>
    %c0_20 = arith.constant 0 : index
    %c0_21 = arith.constant 0 : index
    %52 = vector.load %arg6[%c0_20, %c0_21] : memref<14x224xf32, #tpu.memory_space<vmem>>, vector<14x224xf32>
    %cst_22 = arith.constant dense<0.000000e+00> : vector<14x128xf32>
    %53 = tpu.matmul %52, %51, %cst_22 {dimension_numbers = #tpu.dot_dimension_numbers<[1], [0], [0], [1], [0, 0, 1, 1], [], []>} : vector<14x224xf32>, vector<224x128xf32>, vector<14x128xf32> -> vector<14x128xf32>
    %c0_23 = arith.constant 0 : index
    %c0_24 = arith.constant 0 : index
    %c0_25 = arith.constant 0 : index
    %54 = vector.load %arg7[%c0_23, %c0_24, %c0_25] : memref<1x14x128xf32, #tpu.memory_space<vmem>>, vector<1x14x128xf32>
    %55 = vector.shape_cast %54 : vector<1x14x128xf32> to vector<14x128xf32>
    %56 = vector.shape_cast %53 : vector<14x128xf32> to vector<1x14x128xf32>
    tpu.vector_store %arg7[%c0_23, %c0_24, %c0_25], %56 {strides = array<i32>} : memref<1x14x128xf32, #tpu.memory_space<vmem>>, vector<1x14x128xf32>,
    return
  }
  func.func @transform_0(%arg0: i32) -> (i32, i32, i32) {
    %c0_i32 = arith.constant 0 : i32
    %c0_i32_0 = arith.constant 0 : i32
    %c0_i32_1 = arith.constant 0 : i32
    return %arg0, %c0_i32, %c0_i32_0 : i32, i32, i32
  }
  func.func @transform_1(%arg0: i32) -> (i32, i32) {
    %c0_i32 = arith.constant 0 : i32
    %c0_i32_0 = arith.constant 0 : i32
    %c0_i32_1 = arith.constant 0 : i32
    return %c0_i32, %c0_i32_0 : i32, i32
  }
  func.func @transform_2(%arg0: i32) -> (i32, i32) {
    %c0_i32 = arith.constant 0 : i32
    %c0_i32_0 = arith.constant 0 : i32
    %c0_i32_1 = arith.constant 0 : i32
    return %c0_i32, %c0_i32_0 : i32, i32
  }
  func.func @transform_3(%arg0: i32) -> (i32, i32) {
    %c0_i32 = arith.constant 0 : i32
    %c0_i32_0 = arith.constant 0 : i32
    %c0_i32_1 = arith.constant 0 : i32
    return %c0_i32, %c0_i32_0 : i32, i32
  }
  func.func @transform_4(%arg0: i32) -> (i32, i32) {
    %c0_i32 = arith.constant 0 : i32
    %c0_i32_0 = arith.constant 0 : i32
    %c0_i32_1 = arith.constant 0 : i32
    return %c0_i32, %c0_i32_0 : i32, i32
  }
  func.func @transform_5(%arg0: i32) -> (i32, i32) {
    %c0_i32 = arith.constant 0 : i32
    %c0_i32_0 = arith.constant 0 : i32
    %c0_i32_1 = arith.constant 0 : i32
    return %c0_i32, %c0_i32_0 : i32, i32
  }
  func.func @transform_6(%arg0: i32) -> (i32, i32, i32) {
    %c0_i32 = arith.constant 0 : i32
    %c0_i32_0 = arith.constant 0 : i32
    %c0_i32_1 = arith.constant 0 : i32
    return %arg0, %c0_i32, %c0_i32_0 : i32, i32, i32
  }
}

</mosaic_0001>

<llo_original>
// kernel: tpu_custom_call.1
$region0: #{tpu_custom_call.1}
  #allocation0 [shape = 'u32[]', space=smem, size = 0x4, offset = 0x4, fixed_abs, tag = 'smem constant byte address 0x4 - core index']
  #allocation1 [shape = 'u32[144,128]{1,0:T(1,128)}', space=vmem, size = 0x12000, scoped, tag = 'internal scratch']
  %s0 = inlined_call_operand.vmem [shape: f32[2,224,3], index: 0, kind: input, shape index: {}]
  %s1 = inlined_call_operand.vmem [shape: f32[3,64], index: 1, kind: input, shape index: {}]
  %s2 = inlined_call_operand.vmem [shape: f32[1,64], index: 2, kind: input, shape index: {}]
  %s3 = inlined_call_operand.vmem [shape: f32[64,128], index: 3, kind: input, shape index: {}]
  %s4 = inlined_call_operand.vmem [shape: f32[1,128], index: 4, kind: input, shape index: {}]
  %s5 = inlined_call_operand.vmem [shape: f32[14,224], index: 5, kind: input, shape index: {}]
  %s6 = inlined_call_operand.vmem [shape: f32[2,14,128], index: 6, kind: output, shape index: {}]
  %s7 = sld [smem:[#allocation0]]
  $region57: #{tpu_custom_call.1} parent=0
    _
  %s9 = ssub.s32 1, %s7
  %s10 = scalar_select 0, %s9, %s7
  loop: start=0, step=1, limit=4
  $region2: #{tpu_custom_call.1} parent=0 // loop_pre_header
    _
  $region3: #{tpu_custom_call.1} parent=0 // loop_header
    %s12 = sphi 0, %s16
    %p13 = scmp.ge.s32.totalorder %s12, 4
    %s22 = sphi 0, %s24
    %s25 = sphi 0, %s22
    %s26 = sphi 0, %s25
    %s42 = sphi 0, %s26
    %s46 = sphi 0, %s46
    %s48 = sphi 0, %s46
    %s49 = sphi 0, %s48
    %s63 = sphi 0, %s49
    %s67 = sphi 0, %s67
    %s69 = sphi 0, %s67
    %s70 = sphi 0, %s69
    %s84 = sphi 0, %s70
    %s88 = sphi 0, %s88
    %s90 = sphi 0, %s88
    %s91 = sphi 0, %s90
    %s105 = sphi 0, %s91
    %s109 = sphi 0, %s109
    %s111 = sphi 0, %s109
    %s112 = sphi 0, %s111
    %s126 = sphi 0, %s112
    %s130 = sphi 0, %s130
    %s132 = sphi 0, %s130
    %s133 = sphi 0, %s132
    %s147 = sphi 0, %s133
    %s153 = sphi 0, %s155
    %s156 = sphi 0, %s153
    %s157 = sphi 0, %s156
    %s173 = sphi 0, %s157
  $region4: #{tpu_custom_call.1} parent=0 // loop_header_branch
    %15 = sbr.rel (%p13) target = $region8
  $region5: #{tpu_custom_call.1} parent=0 // loop_body
    %s17 = ssub.s32 %s12, 1
    %s18 = ssub.s32 %s12, 2
    %s19 = sadd.s32 %s12, 1
    %s20 = ssub.s32 %s12, %s19
    %p21 = scmp.eq.s32.totalorder %s20, 0
    %s23 = sadd.s32 %s22, 1
    %s24 = scalar_select %p21, %s22, %s23
    %p27 = pneg %p21
    %p28 = scmp.eq.s32.totalorder %s12, 1
    %p29 = por %p27, %p28
    %p30 = scmp.ne.s32.totalorder %s22, %s25
    %p31 = scmp.eq.s32.totalorder %s12, 0
    %p32 = por %p30, %p31
    %p33 = scmp.ne.s32.totalorder %s22, %s25
    %p34 = scmp.eq.s32.totalorder %s17, 1
    %p35 = por %p33, %p34
    %p36 = scmp.ne.s32.totalorder %s25, %s26
    %p37 = scmp.eq.s32.totalorder %s17, 0
    %p38 = por %p36, %p37
    %p39 = scmp.ne.s32.totalorder %s25, %s26
    %p40 = scmp.eq.s32.totalorder %s18, 1
    %p41 = por %p39, %p40
    %p43 = scmp.ne.s32.totalorder %s26, %s42
    %p44 = scmp.eq.s32.totalorder %s18, 0
    %p45 = por %p43, %p44
    %s47 = sadd.s32 %s46, 1
    %p50 = scmp.eq.s32.totalorder %s12, 1
    %p51 = scmp.ne.s32.totalorder %s46, %s48
    %p52 = scmp.eq.s32.totalorder %s12, 0
    %p53 = por %p51, %p52
    %p54 = scmp.ne.s32.totalorder %s46, %s48
    %p55 = scmp.eq.s32.totalorder %s17, 1
    %p56 = por %p54, %p55
    %p57 = scmp.ne.s32.totalorder %s48, %s49
    %p58 = scmp.eq.s32.totalorder %s17, 0
    %p59 = por %p57, %p58
    %p60 = scmp.ne.s32.totalorder %s48, %s49
    %p61 = scmp.eq.s32.totalorder %s18, 1
    %p62 = por %p60, %p61
    %p64 = scmp.ne.s32.totalorder %s49, %s63
    %p65 = scmp.eq.s32.totalorder %s18, 0
    %p66 = por %p64, %p65
    %s68 = sadd.s32 %s67, 1
    %p71 = scmp.eq.s32.totalorder %s12, 1
    %p72 = scmp.ne.s32.totalorder %s67, %s69
    %p73 = scmp.eq.s32.totalorder %s12, 0
    %p74 = por %p72, %p73
    %p75 = scmp.ne.s32.totalorder %s67, %s69
    %p76 = scmp.eq.s32.totalorder %s17, 1
    %p77 = por %p75, %p76
    %p78 = scmp.ne.s32.totalorder %s69, %s70
    %p79 = scmp.eq.s32.totalorder %s17, 0
    %p80 = por %p78, %p79
    %p81 = scmp.ne.s32.totalorder %s69, %s70
    %p82 = scmp.eq.s32.totalorder %s18, 1
    %p83 = por %p81, %p82
    %p85 = scmp.ne.s32.totalorder %s70, %s84
    %p86 = scmp.eq.s32.totalorder %s18, 0
    %p87 = por %p85, %p86
    %s89 = sadd.s32 %s88, 1
    %p92 = scmp.eq.s32.totalorder %s12, 1
    %p93 = scmp.ne.s32.totalorder %s88, %s90
    %p94 = scmp.eq.s32.totalorder %s12, 0
    %p95 = por %p93, %p94
    %p96 = scmp.ne.s32.totalorder %s88, %s90
    %p97 = scmp.eq.s32.totalorder %s17, 1
    %p98 = por %p96, %p97
    %p99 = scmp.ne.s32.totalorder %s90, %s91
    %p100 = scmp.eq.s32.totalorder %s17, 0
    %p101 = por %p99, %p100
    %p102 = scmp.ne.s32.totalorder %s90, %s91
    %p103 = scmp.eq.s32.totalorder %s18, 1
    %p104 = por %p102, %p103
    %p106 = scmp.ne.s32.totalorder %s91, %s105
    %p107 = scmp.eq.s32.totalorder %s18, 0
    %p108 = por %p106, %p107
    %s110 = sadd.s32 %s109, 1
    %p113 = scmp.eq.s32.totalorder %s12, 1
    %p114 = scmp.ne.s32.totalorder %s109, %s111
    %p115 = scmp.eq.s32.totalorder %s12, 0
    %p116 = por %p114, %p115
    %p117 = scmp.ne.s32.totalorder %s109, %s111
    %p118 = scmp.eq.s32.totalorder %s17, 1
    %p119 = por %p117, %p118
    %p120 = scmp.ne.s32.totalorder %s111, %s112
    %p121 = scmp.eq.s32.totalorder %s17, 0
    %p122 = por %p120, %p121
    %p123 = scmp.ne.s32.totalorder %s111, %s112
    %p124 = scmp.eq.s32.totalorder %s18, 1
    %p125 = por %p123, %p124
    %p127 = scmp.ne.s32.totalorder %s112, %s126
    %p128 = scmp.eq.s32.totalorder %s18, 0
    %p129 = por %p127, %p128
    %s131 = sadd.s32 %s130, 1
    %p134 = scmp.eq.s32.totalorder %s12, 1
    %p135 = scmp.ne.s32.totalorder %s130, %s132
    %p136 = scmp.eq.s32.totalorder %s12, 0
    %p137 = por %p135, %p136
    %p138 = scmp.ne.s32.totalorder %s130, %s132
    %p139 = scmp.eq.s32.totalorder %s17, 1
    %p140 = por %p138, %p139
    %p141 = scmp.ne.s32.totalorder %s132, %s133
    %p142 = scmp.eq.s32.totalorder %s17, 0
    %p143 = por %p141, %p142
    %p144 = scmp.ne.s32.totalorder %s132, %s133
    %p145 = scmp.eq.s32.totalorder %s18, 1
    %p146 = por %p144, %p145
    %p148 = scmp.ne.s32.totalorder %s133, %s147
    %p149 = scmp.eq.s32.totalorder %s18, 0
    %p150 = por %p148, %p149
    %s151 = ssub.s32 %s12, %s19
    %p152 = scmp.eq.s32.totalorder %s151, 0
    %s154 = sadd.s32 %s153, 1
    %s155 = scalar_select %p152, %s153, %s154
    %p158 = pneg %p152
    %p159 = scmp.eq.s32.totalorder %s12, 1
    %p160 = por %p158, %p159
    %p161 = scmp.ne.s32.totalorder %s153, %s156
    %p162 = scmp.eq.s32.totalorder %s12, 0
    %p163 = por %p161, %p162
    %p164 = scmp.ne.s32.totalorder %s153, %s156
    %p165 = scmp.eq.s32.totalorder %s17, 1
    %p166 = por %p164, %p165
    %p167 = scmp.ne.s32.totalorder %s156, %s157
    %p168 = scmp.eq.s32.totalorder %s17, 0
    %p169 = por %p167, %p168
    %p170 = scmp.ne.s32.totalorder %s156, %s157
    %p171 = scmp.eq.s32.totalorder %s18, 1
    %p172 = por %p170, %p171
    %p174 = scmp.ne.s32.totalorder %s157, %s173
    %p175 = scmp.eq.s32.totalorder %s18, 0
    %p176 = por %p174, %p175
    %p177 = scmp.le.s32.totalorder 1, %s12
    %p178 = scmp.lt.s32.totalorder %s12, 3
    %p179 = pnand %p177, %p178
    %p180 = pneg %p179
    // Predicated region
    $region9: #{tpu_custom_call.1} parent=5 // pred_check
      _
    $region10: #{tpu_custom_call.1} parent=5 // pred_check_branch
      %182 = sbr.rel (%p179) target = $region12
    $region11: #{tpu_custom_call.1} parent=5 // pred_region
      %s183 = ssub.s32 %s12, 1
      // Predicated region
      $region13: #{tpu_custom_call.1} parent=11 // pred_check
        %p184 = pneg %p59
      $region14: #{tpu_custom_call.1} parent=11 // pred_check_branch
        %186 = sbr.rel (%p184) target = $region16
      $region15: #{tpu_custom_call.1} parent=11 // pred_region
        _
      $region16: #{tpu_custom_call.1} parent=11 // pred_fallthru
        _
      // Predicated region
      $region17: #{tpu_custom_call.1} parent=11 // pred_check
        %p187 = pneg %p80
      $region18: #{tpu_custom_call.1} parent=11 // pred_check_branch
        %189 = sbr.rel (%p187) target = $region20
      $region19: #{tpu_custom_call.1} parent=11 // pred_region
        _
      $region20: #{tpu_custom_call.1} parent=11 // pred_fallthru
        _
      // Predicated region
      $region21: #{tpu_custom_call.1} parent=11 // pred_check
        %p190 = pneg %p101
      $region22: #{tpu_custom_call.1} parent=11 // pred_check_branch
        %192 = sbr.rel (%p190) target = $region24
      $region23: #{tpu_custom_call.1} parent=11 // pred_region
        _
      $region24: #{tpu_custom_call.1} parent=11 // pred_fallthru
        _
      // Predicated region
      $region25: #{tpu_custom_call.1} parent=11 // pred_check
        %p193 = pneg %p122
      $region26: #{tpu_custom_call.1} parent=11 // pred_check_branch
        %195 = sbr.rel (%p193) target = $region28
      $region27: #{tpu_custom_call.1} parent=11 // pred_region
        _
      $region28: #{tpu_custom_call.1} parent=11 // pred_fallthru
        _
      // Predicated region
      $region29: #{tpu_custom_call.1} parent=11 // pred_check
        %p196 = pneg %p143
      $region30: #{tpu_custom_call.1} parent=11 // pred_check_branch
        %198 = sbr.rel (%p196) target = $region32
      $region31: #{tpu_custom_call.1} parent=11 // pred_region
        _
      $region32: #{tpu_custom_call.1} parent=11 // pred_fallthru
        _
    $region12: #{tpu_custom_call.1} parent=5 // pred_fallthru
      _
    %p199 = scmp.lt.s32.totalorder %s12, 2
    // Predicated region
    $region33: #{tpu_custom_call.1} parent=5 // pred_check
      %p200 = pneg %p199
    $region34: #{tpu_custom_call.1} parent=5 // pred_check_branch
      %202 = sbr.rel (%p200) target = $region36
    $region35: #{tpu_custom_call.1} parent=5 // pred_region
      // Predicated region
      $region37: #{tpu_custom_call.1} parent=35 // pred_check
        %p203 = pneg %p32
      $region38: #{tpu_custom_call.1} parent=35 // pred_check_branch
        %205 = sbr.rel (%p203) target = $region40
      $region39: #{tpu_custom_call.1} parent=35 // pred_region
        %p206 = scmp.lt.s32.totalorder %s12, 1
        %s207 = scalar_select %p206, %s12, 1
        %s208 = smul.addr %s207, 28
        %s209 = smul.addr %s208, 8
        %s210 = scalar_lea.vmem %s0, %s209
      $region40: #{tpu_custom_call.1} parent=35 // pred_fallthru
        _
    $region36: #{tpu_custom_call.1} parent=5 // pred_fallthru
      _
    %p211 = scmp.le.s32.totalorder 1, %s12
    %p212 = scmp.lt.s32.totalorder %s12, 3
    %p213 = pnand %p211, %p212
    %p214 = pneg %p213
    // Predicated region
    $region41: #{tpu_custom_call.1} parent=5 // pred_check
      _
    $region42: #{tpu_custom_call.1} parent=5 // pred_check_branch
      %216 = sbr.rel (%p213) target = $region44
    $region43: #{tpu_custom_call.1} parent=5 // pred_region
      %s217 = ssub.s32 %s12, 1
      %p218 = scmp.lt.s32.totalorder %s17, 1
      %s219 = scalar_select %p218, %s17, 1
      %s220 = smul.addr %s219, 28
      %s221 = smul.addr %s220, 8
      %s222 = scalar_lea.vmem %s0, %s221
      %p223 = pneg %p38
      %p224 = pneg %p35
      %p225 = pneg %p59
      %p226 = pneg %p56
      %p227 = pneg %p80
      %p228 = pneg %p77
      %p229 = pneg %p101
      %p230 = pneg %p98
      %p231 = pneg %p122
      %p232 = pneg %p119
      %p233 = pneg %p143
      %p234 = pneg %p140
      %p235 = pneg %p169
      %p236 = pneg %p166
      %p237 = scmp.lt.s32.totalorder %s17, 1
      %s238 = scalar_select %p237, %s17, 1
      %s239 = smul.addr %s238, 2
      %s240 = smul.addr %s239, 8
      %s241 = scalar_lea.vmem %s6, %s240
      %p242 = scmp.lt.s32.totalorder %s17, 1
      %s243 = scalar_select %p242, %s17, 1
      %s244 = smul.addr %s243, 28
      %s245 = smul.addr %s244, 8
      %s246 = scalar_lea.vmem %s0, %s245
      %p247 = scmp.lt.s32.totalorder %s17, 1
      %s248 = scalar_select %p247, %s17, 1
      %s249 = smul.addr %s248, 2
      %s250 = smul.addr %s249, 8
      %s251 = scalar_lea.vmem %s6, %s250
      %v252 = vld [vmem:[%s246] sm:$0xff]
      %v253 = vld [vmem:[%s246 + $0x8] sm:$0xff]
      %v254 = vld [vmem:[%s246 + $0x10] sm:$0xff]
      %v255 = vld [vmem:[%s246 + $0x18] sm:$0xff]
      %v256 = vld [vmem:[%s246 + $0x20] sm:$0xff]
      %v257 = vld [vmem:[%s246 + $0x28] sm:$0xff]
      %v258 = vld [vmem:[%s246 + $0x30] sm:$0xff]
      %v259 = vld [vmem:[%s246 + $0x38] sm:$0xff]
      %v260 = vld [vmem:[%s246 + $0x40] sm:$0xff]
      %v261 = vld [vmem:[%s246 + $0x48] sm:$0xff]
      %v262 = vld [vmem:[%s246 + $0x50] sm:$0xff]
      %v263 = vld [vmem:[%s246 + $0x58] sm:$0xff]
      %v264 = vld [vmem:[%s246 + $0x60] sm:$0xff]
      %v265 = vld [vmem:[%s246 + $0x68] sm:$0xff]
      %v266 = vld [vmem:[%s246 + $0x70] sm:$0xff]
      %v267 = vld [vmem:[%s246 + $0x78] sm:$0xff]
      %v268 = vld [vmem:[%s246 + $0x80] sm:$0xff]
      %v269 = vld [vmem:[%s246 + $0x88] sm:$0xff]
      %v270 = vld [vmem:[%s246 + $0x90] sm:$0xff]
      %v271 = vld [vmem:[%s246 + $0x98] sm:$0xff]
      %v272 = vld [vmem:[%s246 + $0xa0] sm:$0xff]
      %v273 = vld [vmem:[%s246 + $0xa8] sm:$0xff]
      %v274 = vld [vmem:[%s246 + $0xb0] sm:$0xff]
      %v275 = vld [vmem:[%s246 + $0xb8] sm:$0xff]
      %v276 = vld [vmem:[%s246 + $0xc0] sm:$0xff]
      %v277 = vld [vmem:[%s246 + $0xc8] sm:$0xff]
      %v278 = vld [vmem:[%s246 + $0xd0] sm:$0xff]
      %v279 = vld [vmem:[%s246 + $0xd8] sm:$0xff]
      %v280 = vld [vmem:[%s1] sm:$0x7]
      %282 = vset.pattern.permute.xlu0 0
      %283 = vperm.xlu0 %282, %v252
      %v284 = vpop.permute.xlu0 %283
      %287 = vset.pattern.permute.xlu0 0
      %288 = vperm.xlu0 %287, %v253
      %v289 = vpop.permute.xlu0 %288
      %292 = vset.pattern.permute.xlu0 0
      %293 = vperm.xlu0 %292, %v254
      %v294 = vpop.permute.xlu0 %293
      %297 = vset.pattern.permute.xlu0 0
      %298 = vperm.xlu0 %297, %v255
      %v299 = vpop.permute.xlu0 %298
      %302 = vset.pattern.permute.xlu0 0
      %303 = vperm.xlu0 %302, %v256
      %v304 = vpop.permute.xlu0 %303
      %307 = vset.pattern.permute.xlu0 0
      %308 = vperm.xlu0 %307, %v257
      %v309 = vpop.permute.xlu0 %308
      %312 = vset.pattern.permute.xlu0 0
      %313 = vperm.xlu0 %312, %v258
      %v314 = vpop.permute.xlu0 %313
      %317 = vset.pattern.permute.xlu0 0
      %318 = vperm.xlu0 %317, %v259
      %v319 = vpop.permute.xlu0 %318
      %322 = vset.pattern.permute.xlu0 0
      %323 = vperm.xlu0 %322, %v260
      %v324 = vpop.permute.xlu0 %323
      %327 = vset.pattern.permute.xlu0 0
      %328 = vperm.xlu0 %327, %v261
      %v329 = vpop.permute.xlu0 %328
      %332 = vset.pattern.permute.xlu0 0
      %333 = vperm.xlu0 %332, %v262
      %v334 = vpop.permute.xlu0 %333
      %337 = vset.pattern.permute.xlu0 0
      %338 = vperm.xlu0 %337, %v263
      %v339 = vpop.permute.xlu0 %338
      %342 = vset.pattern.permute.xlu0 0
      %343 = vperm.xlu0 %342, %v264
      %v344 = vpop.permute.xlu0 %343
      %347 = vset.pattern.permute.xlu0 0
      %348 = vperm.xlu0 %347, %v265
      %v349 = vpop.permute.xlu0 %348
      %352 = vset.pattern.permute.xlu0 0
      %353 = vperm.xlu0 %352, %v266
      %v354 = vpop.permute.xlu0 %353
      %357 = vset.pattern.permute.xlu0 0
      %358 = vperm.xlu0 %357, %v267
      %v359 = vpop.permute.xlu0 %358
      %362 = vset.pattern.permute.xlu0 0
      %363 = vperm.xlu0 %362, %v268
      %v364 = vpop.permute.xlu0 %363
      %367 = vset.pattern.permute.xlu0 0
      %368 = vperm.xlu0 %367, %v269
      %v369 = vpop.permute.xlu0 %368
      %372 = vset.pattern.permute.xlu0 0
      %373 = vperm.xlu0 %372, %v270
      %v374 = vpop.permute.xlu0 %373
      %377 = vset.pattern.permute.xlu0 0
      %378 = vperm.xlu0 %377, %v271
      %v379 = vpop.permute.xlu0 %378
      %382 = vset.pattern.permute.xlu0 0
      %383 = vperm.xlu0 %382, %v272
      %v384 = vpop.permute.xlu0 %383
      %387 = vset.pattern.permute.xlu0 0
      %388 = vperm.xlu0 %387, %v273
      %v389 = vpop.permute.xlu0 %388
      %392 = vset.pattern.permute.xlu0 0
      %393 = vperm.xlu0 %392, %v274
      %v394 = vpop.permute.xlu0 %393
      %397 = vset.pattern.permute.xlu0 0
      %398 = vperm.xlu0 %397, %v275
      %v399 = vpop.permute.xlu0 %398
      %402 = vset.pattern.permute.xlu0 0
      %403 = vperm.xlu0 %402, %v276
      %v404 = vpop.permute.xlu0 %403
      %407 = vset.pattern.permute.xlu0 0
      %408 = vperm.xlu0 %407, %v277
      %v409 = vpop.permute.xlu0 %408
      %412 = vset.pattern.permute.xlu0 0
      %413 = vperm.xlu0 %412, %v278
      %v414 = vpop.permute.xlu0 %413
      %417 = vset.pattern.permute.xlu0 0
      %418 = vperm.xlu0 %417, %v279
      %v419 = vpop.permute.xlu0 %418
      %v421 = vlaneseq
      %v422 = vshrl.u32 %v421, 7
      %v423 = vsub.s32 0, %v422
      %v424 = vrot.slane %v280, %v423
      %v425 = vmul.f32 %v284, %v424
      %v426 = vmul.f32 %v289, %v424
      %v427 = vmul.f32 %v294, %v424
      %v428 = vmul.f32 %v299, %v424
      %v429 = vmul.f32 %v304, %v424
      %v430 = vmul.f32 %v309, %v424
      %v431 = vmul.f32 %v314, %v424
      %v432 = vmul.f32 %v319, %v424
      %v433 = vmul.f32 %v324, %v424
      %v434 = vmul.f32 %v329, %v424
      %v435 = vmul.f32 %v334, %v424
      %v436 = vmul.f32 %v339, %v424
      %v437 = vmul.f32 %v344, %v424
      %v438 = vmul.f32 %v349, %v424
      %v439 = vmul.f32 %v354, %v424
      %v440 = vmul.f32 %v359, %v424
      %v441 = vmul.f32 %v364, %v424
      %v442 = vmul.f32 %v369, %v424
      %v443 = vmul.f32 %v374, %v424
      %v444 = vmul.f32 %v379, %v424
      %v445 = vmul.f32 %v384, %v424
      %v446 = vmul.f32 %v389, %v424
      %v447 = vmul.f32 %v394, %v424
      %v448 = vmul.f32 %v399, %v424
      %v449 = vmul.f32 %v404, %v424
      %v450 = vmul.f32 %v409, %v424
      %v451 = vmul.f32 %v414, %v424
      %v452 = vmul.f32 %v419, %v424
      %453 = vset.pattern.permute.xlu0 1
      %454 = vperm.xlu0 %453, %v252
      %v455 = vpop.permute.xlu0 %454
      %457 = vset.pattern.permute.xlu0 1
      %458 = vperm.xlu0 %457, %v253
      %v459 = vpop.permute.xlu0 %458
      %461 = vset.pattern.permute.xlu0 1
      %462 = vperm.xlu0 %461, %v254
      %v463 = vpop.permute.xlu0 %462
      %465 = vset.pattern.permute.xlu0 1
      %466 = vperm.xlu0 %465, %v255
      %v467 = vpop.permute.xlu0 %466
      %469 = vset.pattern.permute.xlu0 1
      %470 = vperm.xlu0 %469, %v256
      %v471 = vpop.permute.xlu0 %470
      %473 = vset.pattern.permute.xlu0 1
      %474 = vperm.xlu0 %473, %v257
      %v475 = vpop.permute.xlu0 %474
      %477 = vset.pattern.permute.xlu0 1
      %478 = vperm.xlu0 %477, %v258
      %v479 = vpop.permute.xlu0 %478
      %481 = vset.pattern.permute.xlu0 1
      %482 = vperm.xlu0 %481, %v259
      %v483 = vpop.permute.xlu0 %482
      %485 = vset.pattern.permute.xlu0 1
      %486 = vperm.xlu0 %485, %v260
      %v487 = vpop.permute.xlu0 %486
      %489 = vset.pattern.permute.xlu0 1
      %490 = vperm.xlu0 %489, %v261
      %v491 = vpop.permute.xlu0 %490
      %493 = vset.pattern.permute.xlu0 1
      %494 = vperm.xlu0 %493, %v262
      %v495 = vpop.permute.xlu0 %494
      %497 = vset.pattern.permute.xlu0 1
      %498 = vperm.xlu0 %497, %v263
      %v499 = vpop.permute.xlu0 %498
      %501 = vset.pattern.permute.xlu0 1
      %502 = vperm.xlu0 %501, %v264
      %v503 = vpop.permute.xlu0 %502
      %505 = vset.pattern.permute.xlu0 1
      %506 = vperm.xlu0 %505, %v265
      %v507 = vpop.permute.xlu0 %506
      %509 = vset.pattern.permute.xlu0 1
      %510 = vperm.xlu0 %509, %v266
      %v511 = vpop.permute.xlu0 %510
      %513 = vset.pattern.permute.xlu0 1
      %514 = vperm.xlu0 %513, %v267
      %v515 = vpop.permute.xlu0 %514
      %517 = vset.pattern.permute.xlu0 1
      %518 = vperm.xlu0 %517, %v268
      %v519 = vpop.permute.xlu0 %518
      %521 = vset.pattern.permute.xlu0 1
      %522 = vperm.xlu0 %521, %v269
      %v523 = vpop.permute.xlu0 %522
      %525 = vset.pattern.permute.xlu0 1
      %526 = vperm.xlu0 %525, %v270
      %v527 = vpop.permute.xlu0 %526
      %529 = vset.pattern.permute.xlu0 1
      %530 = vperm.xlu0 %529, %v271
      %v531 = vpop.permute.xlu0 %530
      %533 = vset.pattern.permute.xlu0 1
      %534 = vperm.xlu0 %533, %v272
      %v535 = vpop.permute.xlu0 %534
      %537 = vset.pattern.permute.xlu0 1
      %538 = vperm.xlu0 %537, %v273
      %v539 = vpop.permute.xlu0 %538
      %541 = vset.pattern.permute.xlu0 1
      %542 = vperm.xlu0 %541, %v274
      %v543 = vpop.permute.xlu0 %542
      %545 = vset.pattern.permute.xlu0 1
      %546 = vperm.xlu0 %545, %v275
      %v547 = vpop.permute.xlu0 %546
      %549 = vset.pattern.permute.xlu0 1
      %550 = vperm.xlu0 %549, %v276
      %v551 = vpop.permute.xlu0 %550
      %553 = vset.pattern.permute.xlu0 1
      %554 = vperm.xlu0 %553, %v277
      %v555 = vpop.permute.xlu0 %554
      %557 = vset.pattern.permute.xlu0 1
      %558 = vperm.xlu0 %557, %v278
      %v559 = vpop.permute.xlu0 %558
      %561 = vset.pattern.permute.xlu0 1
      %562 = vperm.xlu0 %561, %v279
      %v563 = vpop.permute.xlu0 %562
      %v565 = vlaneseq
      %v566 = vshrl.u32 %v565, 7
      %v567 = vsub.s32 1, %v566
      %v568 = vrot.slane %v280, %v567
      %v569 = vmul.f32 %v455, %v568
      %v570 = vmul.f32 %v459, %v568
      %v571 = vmul.f32 %v463, %v568
      %v572 = vmul.f32 %v467, %v568
      %v573 = vmul.f32 %v471, %v568
      %v574 = vmul.f32 %v475, %v568
      %v575 = vmul.f32 %v479, %v568
      %v576 = vmul.f32 %v483, %v568
      %v577 = vmul.f32 %v487, %v568
      %v578 = vmul.f32 %v491, %v568
      %v579 = vmul.f32 %v495, %v568
      %v580 = vmul.f32 %v499, %v568
      %v581 = vmul.f32 %v503, %v568
      %v582 = vmul.f32 %v507, %v568
      %v583 = vmul.f32 %v511, %v568
      %v584 = vmul.f32 %v515, %v568
      %v585 = vmul.f32 %v519, %v568
      %v586 = vmul.f32 %v523, %v568
      %v587 = vmul.f32 %v527, %v568
      %v588 = vmul.f32 %v531, %v568
      %v589 = vmul.f32 %v535, %v568
      %v590 = vmul.f32 %v539, %v568
      %v591 = vmul.f32 %v543, %v568
      %v592 = vmul.f32 %v547, %v568
      %v593 = vmul.f32 %v551, %v568
      %v594 = vmul.f32 %v555, %v568
      %v595 = vmul.f32 %v559, %v568
      %v596 = vmul.f32 %v563, %v568
      %v597 = vadd.f32 %v425, %v569
      %v598 = vadd.f32 %v426, %v570
      %v599 = vadd.f32 %v427, %v571
      %v600 = vadd.f32 %v428, %v572
      %v601 = vadd.f32 %v429, %v573
      %v602 = vadd.f32 %v430, %v574
      %v603 = vadd.f32 %v431, %v575
      %v604 = vadd.f32 %v432, %v576
      %v605 = vadd.f32 %v433, %v577
      %v606 = vadd.f32 %v434, %v578
      %v607 = vadd.f32 %v435, %v579
      %v608 = vadd.f32 %v436, %v580
      %v609 = vadd.f32 %v437, %v581
      %v610 = vadd.f32 %v438, %v582
      %v611 = vadd.f32 %v439, %v583
      %v612 = vadd.f32 %v440, %v584
      %v613 = vadd.f32 %v441, %v585
      %v614 = vadd.f32 %v442, %v586
      %v615 = vadd.f32 %v443, %v587
      %v616 = vadd.f32 %v444, %v588
      %v617 = vadd.f32 %v445, %v589
      %v618 = vadd.f32 %v446, %v590
      %v619 = vadd.f32 %v447, %v591
      %v620 = vadd.f32 %v448, %v592
      %v621 = vadd.f32 %v449, %v593
      %v622 = vadd.f32 %v450, %v594
      %v623 = vadd.f32 %v451, %v595
      %v624 = vadd.f32 %v452, %v596
      %625 = vset.pattern.permute.xlu0 2
      %626 = vperm.xlu0 %625, %v252
      %v627 = vpop.permute.xlu0 %626
      %629 = vset.pattern.permute.xlu0 2
      %630 = vperm.xlu0 %629, %v253
      %v631 = vpop.permute.xlu0 %630
      %633 = vset.pattern.permute.xlu0 2
      %634 = vperm.xlu0 %633, %v254
      %v635 = vpop.permute.xlu0 %634
      %637 = vset.pattern.permute.xlu0 2
      %638 = vperm.xlu0 %637, %v255
      %v639 = vpop.permute.xlu0 %638
      %641 = vset.pattern.permute.xlu0 2
      %642 = vperm.xlu0 %641, %v256
      %v643 = vpop.permute.xlu0 %642
      %645 = vset.pattern.permute.xlu0 2
      %646 = vperm.xlu0 %645, %v257
      %v647 = vpop.permute.xlu0 %646
      %649 = vset.pattern.permute.xlu0 2
      %650 = vperm.xlu0 %649, %v258
      %v651 = vpop.permute.xlu0 %650
      %653 = vset.pattern.permute.xlu0 2
      %654 = vperm.xlu0 %653, %v259
      %v655 = vpop.permute.xlu0 %654
      %657 = vset.pattern.permute.xlu0 2
      %658 = vperm.xlu0 %657, %v260
      %v659 = vpop.permute.xlu0 %658
      %661 = vset.pattern.permute.xlu0 2
      %662 = vperm.xlu0 %661, %v261
      %v663 = vpop.permute.xlu0 %662
      %665 = vset.pattern.permute.xlu0 2
      %666 = vperm.xlu0 %665, %v262
      %v667 = vpop.permute.xlu0 %666
      %669 = vset.pattern.permute.xlu0 2
      %670 = vperm.xlu0 %669, %v263
      %v671 = vpop.permute.xlu0 %670
      %673 = vset.pattern.permute.xlu0 2
      %674 = vperm.xlu0 %673, %v264
      %v675 = vpop.permute.xlu0 %674
      %677 = vset.pattern.permute.xlu0 2
      %678 = vperm.xlu0 %677, %v265
      %v679 = vpop.permute.xlu0 %678
      %681 = vset.pattern.permute.xlu0 2
      %682 = vperm.xlu0 %681, %v266
      %v683 = vpop.permute.xlu0 %682
      %685 = vset.pattern.permute.xlu0 2
      %686 = vperm.xlu0 %685, %v267
      %v687 = vpop.permute.xlu0 %686
      %689 = vset.pattern.permute.xlu0 2
      %690 = vperm.xlu0 %689, %v268
      %v691 = vpop.permute.xlu0 %690
      %693 = vset.pattern.permute.xlu0 2
      %694 = vperm.xlu0 %693, %v269
      %v695 = vpop.permute.xlu0 %694
      %697 = vset.pattern.permute.xlu0 2
      %698 = vperm.xlu0 %697, %v270
      %v699 = vpop.permute.xlu0 %698
      %701 = vset.pattern.permute.xlu0 2
      %702 = vperm.xlu0 %701, %v271
      %v703 = vpop.permute.xlu0 %702
      %705 = vset.pattern.permute.xlu0 2
      %706 = vperm.xlu0 %705, %v272
      %v707 = vpop.permute.xlu0 %706
      %709 = vset.pattern.permute.xlu0 2
      %710 = vperm.xlu0 %709, %v273
      %v711 = vpop.permute.xlu0 %710
      %713 = vset.pattern.permute.xlu0 2
      %714 = vperm.xlu0 %713, %v274
      %v715 = vpop.permute.xlu0 %714
      %717 = vset.pattern.permute.xlu0 2
      %718 = vperm.xlu0 %717, %v275
      %v719 = vpop.permute.xlu0 %718
      %721 = vset.pattern.permute.xlu0 2
      %722 = vperm.xlu0 %721, %v276
      %v723 = vpop.permute.xlu0 %722
      %725 = vset.pattern.permute.xlu0 2
      %726 = vperm.xlu0 %725, %v277
      %v727 = vpop.permute.xlu0 %726
      %729 = vset.pattern.permute.xlu0 2
      %730 = vperm.xlu0 %729, %v278
      %v731 = vpop.permute.xlu0 %730
      %733 = vset.pattern.permute.xlu0 2
      %734 = vperm.xlu0 %733, %v279
      %v735 = vpop.permute.xlu0 %734
      %v737 = vlaneseq
      %v738 = vshrl.u32 %v737, 7
      %v739 = vsub.s32 2, %v738
      %v740 = vrot.slane %v280, %v739
      %v741 = vmul.f32 %v627, %v740
      %v742 = vmul.f32 %v631, %v740
      %v743 = vmul.f32 %v635, %v740
      %v744 = vmul.f32 %v639, %v740
      %v745 = vmul.f32 %v643, %v740
      %v746 = vmul.f32 %v647, %v740
      %v747 = vmul.f32 %v651, %v740
      %v748 = vmul.f32 %v655, %v740
      %v749 = vmul.f32 %v659, %v740
      %v750 = vmul.f32 %v663, %v740
      %v751 = vmul.f32 %v667, %v740
      %v752 = vmul.f32 %v671, %v740
      %v753 = vmul.f32 %v675, %v740
      %v754 = vmul.f32 %v679, %v740
      %v755 = vmul.f32 %v683, %v740
      %v756 = vmul.f32 %v687, %v740
      %v757 = vmul.f32 %v691, %v740
      %v758 = vmul.f32 %v695, %v740
      %v759 = vmul.f32 %v699, %v740
      %v760 = vmul.f32 %v703, %v740
      %v761 = vmul.f32 %v707, %v740
      %v762 = vmul.f32 %v711, %v740
      %v763 = vmul.f32 %v715, %v740
      %v764 = vmul.f32 %v719, %v740
      %v765 = vmul.f32 %v723, %v740
      %v766 = vmul.f32 %v727, %v740
      %v767 = vmul.f32 %v731, %v740
      %v768 = vmul.f32 %v735, %v740
      %v769 = vadd.f32 %v597, %v741
      %v770 = vadd.f32 %v598, %v742
      %v771 = vadd.f32 %v599, %v743
      %v772 = vadd.f32 %v600, %v744
      %v773 = vadd.f32 %v601, %v745
      %v774 = vadd.f32 %v602, %v746
      %v775 = vadd.f32 %v603, %v747
      %v776 = vadd.f32 %v604, %v748
      %v777 = vadd.f32 %v605, %v749
      %v778 = vadd.f32 %v606, %v750
      %v779 = vadd.f32 %v607, %v751
      %v780 = vadd.f32 %v608, %v752
      %v781 = vadd.f32 %v609, %v753
      %v782 = vadd.f32 %v610, %v754
      %v783 = vadd.f32 %v611, %v755
      %v784 = vadd.f32 %v612, %v756
      %v785 = vadd.f32 %v613, %v757
      %v786 = vadd.f32 %v614, %v758
      %v787 = vadd.f32 %v615, %v759
      %v788 = vadd.f32 %v616, %v760
      %v789 = vadd.f32 %v617, %v761
      %v790 = vadd.f32 %v618, %v762
      %v791 = vadd.f32 %v619, %v763
      %v792 = vadd.f32 %v620, %v764
      %v793 = vadd.f32 %v621, %v765
      %v794 = vadd.f32 %v622, %v766
      %v795 = vadd.f32 %v623, %v767
      %v796 = vadd.f32 %v624, %v768
      %v797 = vld [vmem:[%s2] sm:$0x1]
      %v799 = vlaneseq
      %v800 = vshrl.u32 %v799, 7
      %v801 = vsub.s32 0, %v800
      %v802 = vrot.slane %v797, %v801
      %v804 = vadd.f32 %v769, %v802
      %v805 = vadd.f32 %v770, %v802
      %v806 = vadd.f32 %v771, %v802
      %v807 = vadd.f32 %v772, %v802
      %v808 = vadd.f32 %v773, %v802
      %v809 = vadd.f32 %v774, %v802
      %v810 = vadd.f32 %v775, %v802
      %v811 = vadd.f32 %v776, %v802
      %v812 = vadd.f32 %v777, %v802
      %v813 = vadd.f32 %v778, %v802
      %v814 = vadd.f32 %v779, %v802
      %v815 = vadd.f32 %v780, %v802
      %v816 = vadd.f32 %v781, %v802
      %v817 = vadd.f32 %v782, %v802
      %v818 = vadd.f32 %v783, %v802
      %v819 = vadd.f32 %v784, %v802
      %v820 = vadd.f32 %v785, %v802
      %v821 = vadd.f32 %v786, %v802
      %v822 = vadd.f32 %v787, %v802
      %v823 = vadd.f32 %v788, %v802
      %v824 = vadd.f32 %v789, %v802
      %v825 = vadd.f32 %v790, %v802
      %v826 = vadd.f32 %v791, %v802
      %v827 = vadd.f32 %v792, %v802
      %v828 = vadd.f32 %v793, %v802
      %v829 = vadd.f32 %v794, %v802
      %v830 = vadd.f32 %v795, %v802
      %v831 = vadd.f32 %v796, %v802
      %vm832 = vcmp.gt.f32.partialorder %v804, 0.0
      %vm833 = vcmp.gt.f32.partialorder %v805, 0.0
      %vm834 = vcmp.gt.f32.partialorder %v806, 0.0
      %vm835 = vcmp.gt.f32.partialorder %v807, 0.0
      %vm836 = vcmp.gt.f32.partialorder %v808, 0.0
      %vm837 = vcmp.gt.f32.partialorder %v809, 0.0
      %vm838 = vcmp.gt.f32.partialorder %v810, 0.0
      %vm839 = vcmp.gt.f32.partialorder %v811, 0.0
      %vm840 = vcmp.gt.f32.partialorder %v812, 0.0
      %vm841 = vcmp.gt.f32.partialorder %v813, 0.0
      %vm842 = vcmp.gt.f32.partialorder %v814, 0.0
      %vm843 = vcmp.gt.f32.partialorder %v815, 0.0
      %vm844 = vcmp.gt.f32.partialorder %v816, 0.0
      %vm845 = vcmp.gt.f32.partialorder %v817, 0.0
      %vm846 = vcmp.gt.f32.partialorder %v818, 0.0
      %vm847 = vcmp.gt.f32.partialorder %v819, 0.0
      %vm848 = vcmp.gt.f32.partialorder %v820, 0.0
      %vm849 = vcmp.gt.f32.partialorder %v821, 0.0
      %vm850 = vcmp.gt.f32.partialorder %v822, 0.0
      %vm851 = vcmp.gt.f32.partialorder %v823, 0.0
      %vm852 = vcmp.gt.f32.partialorder %v824, 0.0
      %vm853 = vcmp.gt.f32.partialorder %v825, 0.0
      %vm854 = vcmp.gt.f32.partialorder %v826, 0.0
      %vm855 = vcmp.gt.f32.partialorder %v827, 0.0
      %vm856 = vcmp.gt.f32.partialorder %v828, 0.0
      %vm857 = vcmp.gt.f32.partialorder %v829, 0.0
      %vm858 = vcmp.gt.f32.partialorder %v830, 0.0
      %vm859 = vcmp.gt.f32.partialorder %v831, 0.0
      %v860 = vmin.f32 %v804, 0.0
      %v861 = vmin.f32 %v805, 0.0
      %v862 = vmin.f32 %v806, 0.0
      %v863 = vmin.f32 %v807, 0.0
      %v864 = vmin.f32 %v808, 0.0
      %v865 = vmin.f32 %v809, 0.0
      %v866 = vmin.f32 %v810, 0.0
      %v867 = vmin.f32 %v811, 0.0
      %v868 = vmin.f32 %v812, 0.0
      %v869 = vmin.f32 %v813, 0.0
      %v870 = vmin.f32 %v814, 0.0
      %v871 = vmin.f32 %v815, 0.0
      %v872 = vmin.f32 %v816, 0.0
      %v873 = vmin.f32 %v817, 0.0
      %v874 = vmin.f32 %v818, 0.0
      %v875 = vmin.f32 %v819, 0.0
      %v876 = vmin.f32 %v820, 0.0
      %v877 = vmin.f32 %v821, 0.0
      %v878 = vmin.f32 %v822, 0.0
      %v879 = vmin.f32 %v823, 0.0
      %v880 = vmin.f32 %v824, 0.0
      %v881 = vmin.f32 %v825, 0.0
      %v882 = vmin.f32 %v826, 0.0
      %v883 = vmin.f32 %v827, 0.0
      %v884 = vmin.f32 %v828, 0.0
      %v885 = vmin.f32 %v829, 0.0
      %v886 = vmin.f32 %v830, 0.0
      %v887 = vmin.f32 %v831, 0.0
      %v888 = vmul.f32 %v860, 1.442695
      %v889 = vpow.pop %v888
      %v890 = vmul.f32 %v861, 1.442695
      %v891 = vpow.pop %v890
      %v892 = vmul.f32 %v862, 1.442695
      %v893 = vpow.pop %v892
      %v894 = vmul.f32 %v863, 1.442695
      %v895 = vpow.pop %v894
      %v896 = vmul.f32 %v864, 1.442695
      %v897 = vpow.pop %v896
      %v898 = vmul.f32 %v865, 1.442695
      %v899 = vpow.pop %v898
      %v900 = vmul.f32 %v866, 1.442695
      %v901 = vpow.pop %v900
      %v902 = vmul.f32 %v867, 1.442695
      %v903 = vpow.pop %v902
      %v904 = vmul.f32 %v868, 1.442695
      %v905 = vpow.pop %v904
      %v906 = vmul.f32 %v869, 1.442695
      %v907 = vpow.pop %v906
      %v908 = vmul.f32 %v870, 1.442695
      %v909 = vpow.pop %v908
      %v910 = vmul.f32 %v871, 1.442695
      %v911 = vpow.pop %v910
      %v912 = vmul.f32 %v872, 1.442695
      %v913 = vpow.pop %v912
      %v914 = vmul.f32 %v873, 1.442695
      %v915 = vpow.pop %v914
      %v916 = vmul.f32 %v874, 1.442695
      %v917 = vpow.pop %v916
      %v918 = vmul.f32 %v875, 1.442695
      %v919 = vpow.pop %v918
      %v920 = vmul.f32 %v876, 1.442695
      %v921 = vpow.pop %v920
      %v922 = vmul.f32 %v877, 1.442695
      %v923 = vpow.pop %v922
      %v924 = vmul.f32 %v878, 1.442695
      %v925 = vpow.pop %v924
      %v926 = vmul.f32 %v879, 1.442695
      %v927 = vpow.pop %v926
      %v928 = vmul.f32 %v880, 1.442695
      %v929 = vpow.pop %v928
      %v930 = vmul.f32 %v881, 1.442695
      %v931 = vpow.pop %v930
      %v932 = vmul.f32 %v882, 1.442695
      %v933 = vpow.pop %v932
      %v934 = vmul.f32 %v883, 1.442695
      %v935 = vpow.pop %v934
      %v936 = vmul.f32 %v884, 1.442695
      %v937 = vpow.pop %v936
      %v938 = vmul.f32 %v885, 1.442695
      %v939 = vpow.pop %v938
      %v940 = vmul.f32 %v886, 1.442695
      %v941 = vpow.pop %v940
      %v942 = vmul.f32 %v887, 1.442695
      %v943 = vpow.pop %v942
      %v944 = vsub.f32 %v889, 1.0
      %v945 = vsub.f32 %v891, 1.0
      %v946 = vsub.f32 %v893, 1.0
      %v947 = vsub.f32 %v895, 1.0
      %v948 = vsub.f32 %v897, 1.0
      %v949 = vsub.f32 %v899, 1.0
      %v950 = vsub.f32 %v901, 1.0
      %v951 = vsub.f32 %v903, 1.0
      %v952 = vsub.f32 %v905, 1.0
      %v953 = vsub.f32 %v907, 1.0
      %v954 = vsub.f32 %v909, 1.0
      %v955 = vsub.f32 %v911, 1.0
      %v956 = vsub.f32 %v913, 1.0
      %v957 = vsub.f32 %v915, 1.0
      %v958 = vsub.f32 %v917, 1.0
      %v959 = vsub.f32 %v919, 1.0
      %v960 = vsub.f32 %v921, 1.0
      %v961 = vsub.f32 %v923, 1.0
      %v962 = vsub.f32 %v925, 1.0
      %v963 = vsub.f32 %v927, 1.0
      %v964 = vsub.f32 %v929, 1.0
      %v965 = vsub.f32 %v931, 1.0
      %v966 = vsub.f32 %v933, 1.0
      %v967 = vsub.f32 %v935, 1.0
      %v968 = vsub.f32 %v937, 1.0
      %v969 = vsub.f32 %v939, 1.0
      %v970 = vsub.f32 %v941, 1.0
      %v971 = vsub.f32 %v943, 1.0
      %v972 = vmul.f32 %v944, 1.6732632
      %v973 = vmul.f32 %v945, 1.6732632
      %v974 = vmul.f32 %v946, 1.6732632
      %v975 = vmul.f32 %v947, 1.6732632
      %v976 = vmul.f32 %v948, 1.6732632
      %v977 = vmul.f32 %v949, 1.6732632
      %v978 = vmul.f32 %v950, 1.6732632
      %v979 = vmul.f32 %v951, 1.6732632
      %v980 = vmul.f32 %v952, 1.6732632
      %v981 = vmul.f32 %v953, 1.6732632
      %v982 = vmul.f32 %v954, 1.6732632
      %v983 = vmul.f32 %v955, 1.6732632
      %v984 = vmul.f32 %v956, 1.6732632
      %v985 = vmul.f32 %v957, 1.6732632
      %v986 = vmul.f32 %v958, 1.6732632
      %v987 = vmul.f32 %v959, 1.6732632
      %v988 = vmul.f32 %v960, 1.6732632
      %v989 = vmul.f32 %v961, 1.6732632
      %v990 = vmul.f32 %v962, 1.6732632
      %v991 = vmul.f32 %v963, 1.6732632
      %v992 = vmul.f32 %v964, 1.6732632
      %v993 = vmul.f32 %v965, 1.6732632
      %v994 = vmul.f32 %v966, 1.6732632
      %v995 = vmul.f32 %v967, 1.6732632
      %v996 = vmul.f32 %v968, 1.6732632
      %v997 = vmul.f32 %v969, 1.6732632
      %v998 = vmul.f32 %v970, 1.6732632
      %v999 = vmul.f32 %v971, 1.6732632
      %v1000 = vsel %vm832, %v804, %v972
      %v1001 = vsel %vm833, %v805, %v973
      %v1002 = vsel %vm834, %v806, %v974
      %v1003 = vsel %vm835, %v807, %v975
      %v1004 = vsel %vm836, %v808, %v976
      %v1005 = vsel %vm837, %v809, %v977
      %v1006 = vsel %vm838, %v810, %v978
      %v1007 = vsel %vm839, %v811, %v979
      %v1008 = vsel %vm840, %v812, %v980
      %v1009 = vsel %vm841, %v813, %v981
      %v1010 = vsel %vm842, %v814, %v982
      %v1011 = vsel %vm843, %v815, %v983
      %v1012 = vsel %vm844, %v816, %v984
      %v1013 = vsel %vm845, %v817, %v985
      %v1014 = vsel %vm846, %v818, %v986
      %v1015 = vsel %vm847, %v819, %v987
      %v1016 = vsel %vm848, %v820, %v988
      %v1017 = vsel %vm849, %v821, %v989
      %v1018 = vsel %vm850, %v822, %v990
      %v1019 = vsel %vm851, %v823, %v991
      %v1020 = vsel %vm852, %v824, %v992
      %v1021 = vsel %vm853, %v825, %v993
      %v1022 = vsel %vm854, %v826, %v994
      %v1023 = vsel %vm855, %v827, %v995
      %v1024 = vsel %vm856, %v828, %v996
      %v1025 = vsel %vm857, %v829, %v997
      %v1026 = vsel %vm858, %v830, %v998
      %v1027 = vsel %vm859, %v831, %v999
      %v1028 = vmul.f32 %v1000, 1.050701
      %v1029 = vmul.f32 %v1001, 1.050701
      %v1030 = vmul.f32 %v1002, 1.050701
      %v1031 = vmul.f32 %v1003, 1.050701
      %v1032 = vmul.f32 %v1004, 1.050701
      %v1033 = vmul.f32 %v1005, 1.050701
      %v1034 = vmul.f32 %v1006, 1.050701
      %v1035 = vmul.f32 %v1007, 1.050701
      %v1036 = vmul.f32 %v1008, 1.050701
      %v1037 = vmul.f32 %v1009, 1.050701
      %v1038 = vmul.f32 %v1010, 1.050701
      %v1039 = vmul.f32 %v1011, 1.050701
      %v1040 = vmul.f32 %v1012, 1.050701
      %v1041 = vmul.f32 %v1013, 1.050701
      %v1042 = vmul.f32 %v1014, 1.050701
      %v1043 = vmul.f32 %v1015, 1.050701
      %v1044 = vmul.f32 %v1016, 1.050701
      %v1045 = vmul.f32 %v1017, 1.050701
      %v1046 = vmul.f32 %v1018, 1.050701
      %v1047 = vmul.f32 %v1019, 1.050701
      %v1048 = vmul.f32 %v1020, 1.050701
      %v1049 = vmul.f32 %v1021, 1.050701
      %v1050 = vmul.f32 %v1022, 1.050701
      %v1051 = vmul.f32 %v1023, 1.050701
      %v1052 = vmul.f32 %v1024, 1.050701
      %v1053 = vmul.f32 %v1025, 1.050701
      %v1054 = vmul.f32 %v1026, 1.050701
      %v1055 = vmul.f32 %v1027, 1.050701
      %v1056 = vld [vmem:[%s3] sm:$0xff]
      %v1057 = vld [vmem:[%s3 + $0x8] sm:$0xff]
      %v1058 = vld [vmem:[%s3 + $0x10] sm:$0xff]
      %v1059 = vld [vmem:[%s3 + $0x18] sm:$0xff]
      %v1060 = vld [vmem:[%s3 + $0x20] sm:$0xff]
      %v1061 = vld [vmem:[%s3 + $0x28] sm:$0xff]
      %v1062 = vld [vmem:[%s3 + $0x30] sm:$0xff]
      %v1063 = vld [vmem:[%s3 + $0x38] sm:$0xff]
      %v1064 = vld [vmem:[%s4] sm:$0x1]
      %v1066 = vlaneseq
      %v1067 = vshrl.u32 %v1066, 7
      %v1068 = vsub.s32 0, %v1067
      %v1069 = vrot.slane %v1064, %v1068
      %vm1071 = vcmask 523264
      %v1073 = vsel %vm1071, %v1028, 0
      %v1076 = vsel %vm1071, %v1029, 0
      %v1079 = vsel %vm1071, %v1030, 0
      %v1082 = vsel %vm1071, %v1031, 0
      %v1085 = vsel %vm1071, %v1032, 0
      %v1088 = vsel %vm1071, %v1033, 0
      %v1091 = vsel %vm1071, %v1034, 0
      %v1094 = vsel %vm1071, %v1035, 0
      %v1097 = vsel %vm1071, %v1036, 0
      %v1100 = vsel %vm1071, %v1037, 0
      %v1103 = vsel %vm1071, %v1038, 0
      %v1106 = vsel %vm1071, %v1039, 0
      %v1109 = vsel %vm1071, %v1040, 0
      %v1112 = vsel %vm1071, %v1041, 0
      %v1115 = vsel %vm1071, %v1042, 0
      %v1118 = vsel %vm1071, %v1043, 0
      %v1121 = vsel %vm1071, %v1044, 0
      %v1124 = vsel %vm1071, %v1045, 0
      %v1127 = vsel %vm1071, %v1046, 0
      %v1130 = vsel %vm1071, %v1047, 0
      %v1133 = vsel %vm1071, %v1048, 0
      %v1136 = vsel %vm1071, %v1049, 0
      %v1139 = vsel %vm1071, %v1050, 0
      %v1142 = vsel %vm1071, %v1051, 0
      %v1145 = vsel %vm1071, %v1052, 0
      %v1148 = vsel %vm1071, %v1053, 0
      %v1151 = vsel %vm1071, %v1054, 0
      %v1154 = vsel %vm1071, %v1055, 0
      %1156 = vmatprep.subr.mxu0 0.0
      %1157 = vmatpush1.msra.mxu0 %v1056
      %1158 = vmatprep.subr.mxu0 0.0
      %1159 = vmatpush1.msra.mxu0 %v1057
      %1160 = vmatprep.subr.mxu0 0.0
      %1161 = vmatpush1.msra.mxu0 %v1058
      %1162 = vmatprep.subr.mxu0 0.0
      %1163 = vmatpush1.msra.mxu0 %v1059
      %1164 = vmatprep.subr.mxu0 0.0
      %1165 = vmatpush1.msra.mxu0 %v1060
      %1166 = vmatprep.subr.mxu0 0.0
      %1167 = vmatpush1.msra.mxu0 %v1061
      %1168 = vmatprep.subr.mxu0 0.0
      %1169 = vmatpush1.msra.mxu0 %v1062
      %1170 = vmatprep.subr.mxu0 0.0
      %1171 = vmatpush1.msra.mxu0 %v1063
      %1172 = vmatprep.subr.mxu0 0.0
      %1173 = vmatpush1.msra.mxu0 0.0
      %1174 = vmatprep.subr.mxu0 0.0
      %1175 = vmatpush1.msra.mxu0 0.0
      %1176 = vmatprep.subr.mxu0 0.0
      %1177 = vmatpush1.msra.mxu0 0.0
      %1178 = vmatprep.subr.mxu0 0.0
      %1179 = vmatpush1.msra.mxu0 0.0
      %1180 = vmatprep.subr.mxu0 0.0
      %1181 = vmatpush1.msra.mxu0 0.0
      %1182 = vmatprep.subr.mxu0 0.0
      %1183 = vmatpush1.msra.mxu0 0.0
      %1184 = vmatprep.subr.mxu0 0.0
      %1185 = vmatpush1.msra.mxu0 0.0
      %1186 = vmatprep.subr.mxu0 0.0
      %1187 = vmatpush1.msra.mxu0 0.0
      %1188 = vmatprep.subr.mxu0 0.0
      %1189 = vmatpush1.msra.mxu0 0.0
      %1190 = vmatprep.subr.mxu0 0.0
      %1191 = vmatpush1.msra.mxu0 0.0
      %1192 = vmatprep.subr.mxu0 0.0
      %1193 = vmatpush1.msra.mxu0 0.0
      %1194 = vmatprep.subr.mxu0 0.0
      %1195 = vmatpush1.msra.mxu0 0.0
      %1196 = vmatprep.subr.mxu0 0.0
      %1197 = vmatpush1.msra.mxu0 0.0
      %1198 = vmatprep.subr.mxu0 0.0
      %1199 = vmatpush1.msra.mxu0 0.0
      %1200 = vmatprep.subr.mxu0 0.0
      %1201 = vmatpush1.msra.mxu0 0.0
      %1202 = vmatprep.subr.mxu0 0.0
      %1203 = vmatpush1.msra.mxu0 0.0
      %1204 = vmatprep.subr.mxu0 0.0
      %1205 = vmatpush1.msra.mxu0 0.0
      %1206 = vmatprep.subr.mxu0 0.0
      %1207 = vmatpush1.msra.mxu0 0.0
      %1208 = vmatprep.subr.mxu0 0.0
      %1209 = vmatpush1.msra.mxu0 0.0
      %1210 = vmatprep.subr.mxu0 0.0
      %1211 = vmatpush1.msra.mxu0 0.0
      %1212 = vmatprep.subr.mxu0 0.0
      %1213 = vmatpush1.msra.mxu0 0.0
      %1214 = vmatprep.subr.mxu0 0.0
      %1215 = vmatpush1.msra.mxu0 0.0
      %1216 = vmatprep.subr.mxu0 0.0
      %1217 = vmatpush1.msra.mxu0 0.0
      %1218 = vmatprep.subr.mxu0 0.0
      %1219 = vmatpush1.msra.mxu0 0.0
      %1220 = vmatprep.mubr.f32.mxu0 0.0
      %1221 = vmatmul.mubr.f32.gmra.mrb[0].mxu0 %v1073
      %v1222 = vpop.f32.mrb[0].mxu0
      %v1223 = vadd.f32 %v1069, %v1222
      %v1224 = vpop.f32.mrb[0].mxu0
      %1225 = vmatprep.mubr.f32.mxu0 0.0
      %1226 = vmatmul.mubr.f32.gmra.mrb[0].mxu0 %v1076
      %v1227 = vpop.f32.mrb[0].mxu0
      %v1228 = vadd.f32 %v1069, %v1227
      %v1229 = vpop.f32.mrb[0].mxu0
      %1230 = vmatprep.mubr.f32.mxu0 0.0
      %1231 = vmatmul.mubr.f32.gmra.mrb[0].mxu0 %v1079
      %v1232 = vpop.f32.mrb[0].mxu0
      %v1233 = vadd.f32 %v1069, %v1232
      %v1234 = vpop.f32.mrb[0].mxu0
      %1235 = vmatprep.mubr.f32.mxu0 0.0
      %1236 = vmatmul.mubr.f32.gmra.mrb[0].mxu0 %v1082
      %v1237 = vpop.f32.mrb[0].mxu0
      %v1238 = vadd.f32 %v1069, %v1237
      %v1239 = vpop.f32.mrb[0].mxu0
      %1240 = vmatprep.mubr.f32.mxu0 0.0
      %1241 = vmatmul.mubr.f32.gmra.mrb[0].mxu0 %v1085
      %v1242 = vpop.f32.mrb[0].mxu0
      %v1243 = vadd.f32 %v1069, %v1242
      %v1244 = vpop.f32.mrb[0].mxu0
      %1245 = vmatprep.mubr.f32.mxu0 0.0
      %1246 = vmatmul.mubr.f32.gmra.mrb[0].mxu0 %v1088
      %v1247 = vpop.f32.mrb[0].mxu0
      %v1248 = vadd.f32 %v1069, %v1247
      %v1249 = vpop.f32.mrb[0].mxu0
      %1250 = vmatprep.mubr.f32.mxu0 0.0
      %1251 = vmatmul.mubr.f32.gmra.mrb[0].mxu0 %v1091
      %v1252 = vpop.f32.mrb[0].mxu0
      %v1253 = vadd.f32 %v1069, %v1252
      %v1254 = vpop.f32.mrb[0].mxu0
      %1255 = vmatprep.mubr.f32.mxu0 0.0
      %1256 = vmatmul.mubr.f32.gmra.mrb[0].mxu0 %v1094
      %v1257 = vpop.f32.mrb[0].mxu0
      %v1258 = vadd.f32 %v1069, %v1257
      %v1259 = vpop.f32.mrb[0].mxu0
      %1260 = vmatprep.mubr.f32.mxu0 0.0
      %1261 = vmatmul.mubr.f32.gmra.mrb[0].mxu0 %v1097
      %v1262 = vpop.f32.mrb[0].mxu0
      %v1263 = vadd.f32 %v1069, %v1262
      %v1264 = vpop.f32.mrb[0].mxu0
      %1265 = vmatprep.mubr.f32.mxu0 0.0
      %1266 = vmatmul.mubr.f32.gmra.mrb[0].mxu0 %v1100
      %v1267 = vpop.f32.mrb[0].mxu0
      %v1268 = vadd.f32 %v1069, %v1267
      %v1269 = vpop.f32.mrb[0].mxu0
      %1270 = vmatprep.mubr.f32.mxu0 0.0
      %1271 = vmatmul.mubr.f32.gmra.mrb[0].mxu0 %v1103
      %v1272 = vpop.f32.mrb[0].mxu0
      %v1273 = vadd.f32 %v1069, %v1272
      %v1274 = vpop.f32.mrb[0].mxu0
      %1275 = vmatprep.mubr.f32.mxu0 0.0
      %1276 = vmatmul.mubr.f32.gmra.mrb[0].mxu0 %v1106
      %v1277 = vpop.f32.mrb[0].mxu0
      %v1278 = vadd.f32 %v1069, %v1277
      %v1279 = vpop.f32.mrb[0].mxu0
      %1280 = vmatprep.mubr.f32.mxu0 0.0
      %1281 = vmatmul.mubr.f32.gmra.mrb[0].mxu0 %v1109
      %v1282 = vpop.f32.mrb[0].mxu0
      %v1283 = vadd.f32 %v1069, %v1282
      %v1284 = vpop.f32.mrb[0].mxu0
      %1285 = vmatprep.mubr.f32.mxu0 0.0
      %1286 = vmatmul.mubr.f32.gmra.mrb[0].mxu0 %v1112
      %v1287 = vpop.f32.mrb[0].mxu0
      %v1288 = vadd.f32 %v1069, %v1287
      %v1289 = vpop.f32.mrb[0].mxu0
      %1290 = vmatprep.mubr.f32.mxu0 0.0
      %1291 = vmatmul.mubr.f32.gmra.mrb[0].mxu0 %v1115
      %v1292 = vpop.f32.mrb[0].mxu0
      %v1293 = vadd.f32 %v1069, %v1292
      %v1294 = vpop.f32.mrb[0].mxu0
      %1295 = vmatprep.mubr.f32.mxu0 0.0
      %1296 = vmatmul.mubr.f32.gmra.mrb[0].mxu0 %v1118
      %v1297 = vpop.f32.mrb[0].mxu0
      %v1298 = vadd.f32 %v1069, %v1297
      %v1299 = vpop.f32.mrb[0].mxu0
      %1300 = vmatprep.mubr.f32.mxu0 0.0
      %1301 = vmatmul.mubr.f32.gmra.mrb[0].mxu0 %v1121
      %v1302 = vpop.f32.mrb[0].mxu0
      %v1303 = vadd.f32 %v1069, %v1302
      %v1304 = vpop.f32.mrb[0].mxu0
      %1305 = vmatprep.mubr.f32.mxu0 0.0
      %1306 = vmatmul.mubr.f32.gmra.mrb[0].mxu0 %v1124
      %v1307 = vpop.f32.mrb[0].mxu0
      %v1308 = vadd.f32 %v1069, %v1307
      %v1309 = vpop.f32.mrb[0].mxu0
      %1310 = vmatprep.mubr.f32.mxu0 0.0
      %1311 = vmatmul.mubr.f32.gmra.mrb[0].mxu0 %v1127
      %v1312 = vpop.f32.mrb[0].mxu0
      %v1313 = vadd.f32 %v1069, %v1312
      %v1314 = vpop.f32.mrb[0].mxu0
      %1315 = vmatprep.mubr.f32.mxu0 0.0
      %1316 = vmatmul.mubr.f32.gmra.mrb[0].mxu0 %v1130
      %v1317 = vpop.f32.mrb[0].mxu0
      %v1318 = vadd.f32 %v1069, %v1317
      %v1319 = vpop.f32.mrb[0].mxu0
      %1320 = vmatprep.mubr.f32.mxu0 0.0
      %1321 = vmatmul.mubr.f32.gmra.mrb[0].mxu0 %v1133
      %v1322 = vpop.f32.mrb[0].mxu0
      %v1323 = vadd.f32 %v1069, %v1322
      %v1324 = vpop.f32.mrb[0].mxu0
      %1325 = vmatprep.mubr.f32.mxu0 0.0
      %1326 = vmatmul.mubr.f32.gmra.mrb[0].mxu0 %v1136
      %v1327 = vpop.f32.mrb[0].mxu0
      %v1328 = vadd.f32 %v1069, %v1327
      %v1329 = vpop.f32.mrb[0].mxu0
      %1330 = vmatprep.mubr.f32.mxu0 0.0
      %1331 = vmatmul.mubr.f32.gmra.mrb[0].mxu0 %v1139
      %v1332 = vpop.f32.mrb[0].mxu0
      %v1333 = vadd.f32 %v1069, %v1332
      %v1334 = vpop.f32.mrb[0].mxu0
      %1335 = vmatprep.mubr.f32.mxu0 0.0
      %1336 = vmatmul.mubr.f32.gmra.mrb[0].mxu0 %v1142
      %v1337 = vpop.f32.mrb[0].mxu0
      %v1338 = vadd.f32 %v1069, %v1337
      %v1339 = vpop.f32.mrb[0].mxu0
      %1340 = vmatprep.mubr.f32.mxu0 0.0
      %1341 = vmatmul.mubr.f32.gmra.mrb[0].mxu0 %v1145
      %v1342 = vpop.f32.mrb[0].mxu0
      %v1343 = vadd.f32 %v1069, %v1342
      %v1344 = vpop.f32.mrb[0].mxu0
      %1345 = vmatprep.mubr.f32.mxu0 0.0
      %1346 = vmatmul.mubr.f32.gmra.mrb[0].mxu0 %v1148
      %v1347 = vpop.f32.mrb[0].mxu0
      %v1348 = vadd.f32 %v1069, %v1347
      %v1349 = vpop.f32.mrb[0].mxu0
      %1350 = vmatprep.mubr.f32.mxu0 0.0
      %1351 = vmatmul.mubr.f32.gmra.mrb[0].mxu0 %v1151
      %v1352 = vpop.f32.mrb[0].mxu0
      %v1353 = vadd.f32 %v1069, %v1352
      %v1354 = vpop.f32.mrb[0].mxu0
      %1355 = vmatprep.mubr.f32.mxu0 0.0
      %1356 = vmatmul.mubr.f32.gmra.mrb[0].mxu0 %v1154
      %v1357 = vpop.f32.mrb[0].mxu0
      %v1358 = vadd.f32 %v1069, %v1357
      %v1359 = vpop.f32.mrb[0].mxu0
      %1360 = vdwg.mxu0
      %vm1361 = vcmp.gt.f32.partialorder %v1223, 0.0
      %vm1362 = vcmp.gt.f32.partialorder %v1228, 0.0
      %vm1363 = vcmp.gt.f32.partialorder %v1233, 0.0
      %vm1364 = vcmp.gt.f32.partialorder %v1238, 0.0
      %vm1365 = vcmp.gt.f32.partialorder %v1243, 0.0
      %vm1366 = vcmp.gt.f32.partialorder %v1248, 0.0
      %vm1367 = vcmp.gt.f32.partialorder %v1253, 0.0
      %vm1368 = vcmp.gt.f32.partialorder %v1258, 0.0
      %vm1369 = vcmp.gt.f32.partialorder %v1263, 0.0
      %vm1370 = vcmp.gt.f32.partialorder %v1268, 0.0
      %vm1371 = vcmp.gt.f32.partialorder %v1273, 0.0
      %vm1372 = vcmp.gt.f32.partialorder %v1278, 0.0
      %vm1373 = vcmp.gt.f32.partialorder %v1283, 0.0
      %vm1374 = vcmp.gt.f32.partialorder %v1288, 0.0
      %vm1375 = vcmp.gt.f32.partialorder %v1293, 0.0
      %vm1376 = vcmp.gt.f32.partialorder %v1298, 0.0
      %vm1377 = vcmp.gt.f32.partialorder %v1303, 0.0
      %vm1378 = vcmp.gt.f32.partialorder %v1308, 0.0
      %vm1379 = vcmp.gt.f32.partialorder %v1313, 0.0
      %vm1380 = vcmp.gt.f32.partialorder %v1318, 0.0
      %vm1381 = vcmp.gt.f32.partialorder %v1323, 0.0
      %vm1382 = vcmp.gt.f32.partialorder %v1328, 0.0
      %vm1383 = vcmp.gt.f32.partialorder %v1333, 0.0
      %vm1384 = vcmp.gt.f32.partialorder %v1338, 0.0
      %vm1385 = vcmp.gt.f32.partialorder %v1343, 0.0
      %vm1386 = vcmp.gt.f32.partialorder %v1348, 0.0
      %vm1387 = vcmp.gt.f32.partialorder %v1353, 0.0
      %vm1388 = vcmp.gt.f32.partialorder %v1358, 0.0
      %v1389 = vmin.f32 %v1223, 0.0
      %v1390 = vmin.f32 %v1228, 0.0
      %v1391 = vmin.f32 %v1233, 0.0
      %v1392 = vmin.f32 %v1238, 0.0
      %v1393 = vmin.f32 %v1243, 0.0
      %v1394 = vmin.f32 %v1248, 0.0
      %v1395 = vmin.f32 %v1253, 0.0
      %v1396 = vmin.f32 %v1258, 0.0
      %v1397 = vmin.f32 %v1263, 0.0
      %v1398 = vmin.f32 %v1268, 0.0
      %v1399 = vmin.f32 %v1273, 0.0
      %v1400 = vmin.f32 %v1278, 0.0
      %v1401 = vmin.f32 %v1283, 0.0
      %v1402 = vmin.f32 %v1288, 0.0
      %v1403 = vmin.f32 %v1293, 0.0
      %v1404 = vmin.f32 %v1298, 0.0
      %v1405 = vmin.f32 %v1303, 0.0
      %v1406 = vmin.f32 %v1308, 0.0
      %v1407 = vmin.f32 %v1313, 0.0
      %v1408 = vmin.f32 %v1318, 0.0
      %v1409 = vmin.f32 %v1323, 0.0
      %v1410 = vmin.f32 %v1328, 0.0
      %v1411 = vmin.f32 %v1333, 0.0
      %v1412 = vmin.f32 %v1338, 0.0
      %v1413 = vmin.f32 %v1343, 0.0
      %v1414 = vmin.f32 %v1348, 0.0
      %v1415 = vmin.f32 %v1353, 0.0
      %v1416 = vmin.f32 %v1358, 0.0
      %v1417 = vmul.f32 %v1389, 1.442695
      %v1418 = vpow.pop %v1417
      %v1419 = vmul.f32 %v1390, 1.442695
      %v1420 = vpow.pop %v1419
      %v1421 = vmul.f32 %v1391, 1.442695
      %v1422 = vpow.pop %v1421
      %v1423 = vmul.f32 %v1392, 1.442695
      %v1424 = vpow.pop %v1423
      %v1425 = vmul.f32 %v1393, 1.442695
      %v1426 = vpow.pop %v1425
      %v1427 = vmul.f32 %v1394, 1.442695
      %v1428 = vpow.pop %v1427
      %v1429 = vmul.f32 %v1395, 1.442695
      %v1430 = vpow.pop %v1429
      %v1431 = vmul.f32 %v1396, 1.442695
      %v1432 = vpow.pop %v1431
      %v1433 = vmul.f32 %v1397, 1.442695
      %v1434 = vpow.pop %v1433
      %v1435 = vmul.f32 %v1398, 1.442695
      %v1436 = vpow.pop %v1435
      %v1437 = vmul.f32 %v1399, 1.442695
      %v1438 = vpow.pop %v1437
      %v1439 = vmul.f32 %v1400, 1.442695
      %v1440 = vpow.pop %v1439
      %v1441 = vmul.f32 %v1401, 1.442695
      %v1442 = vpow.pop %v1441
      %v1443 = vmul.f32 %v1402, 1.442695
      %v1444 = vpow.pop %v1443
      %v1445 = vmul.f32 %v1403, 1.442695
      %v1446 = vpow.pop %v1445
      %v1447 = vmul.f32 %v1404, 1.442695
      %v1448 = vpow.pop %v1447
      %v1449 = vmul.f32 %v1405, 1.442695
      %v1450 = vpow.pop %v1449
      %v1451 = vmul.f32 %v1406, 1.442695
      %v1452 = vpow.pop %v1451
      %v1453 = vmul.f32 %v1407, 1.442695
      %v1454 = vpow.pop %v1453
      %v1455 = vmul.f32 %v1408, 1.442695
      %v1456 = vpow.pop %v1455
      %v1457 = vmul.f32 %v1409, 1.442695
      %v1458 = vpow.pop %v1457
      %v1459 = vmul.f32 %v1410, 1.442695
      %v1460 = vpow.pop %v1459
      %v1461 = vmul.f32 %v1411, 1.442695
      %v1462 = vpow.pop %v1461
      %v1463 = vmul.f32 %v1412, 1.442695
      %v1464 = vpow.pop %v1463
      %v1465 = vmul.f32 %v1413, 1.442695
      %v1466 = vpow.pop %v1465
      %v1467 = vmul.f32 %v1414, 1.442695
      %v1468 = vpow.pop %v1467
      %v1469 = vmul.f32 %v1415, 1.442695
      %v1470 = vpow.pop %v1469
      %v1471 = vmul.f32 %v1416, 1.442695
      %v1472 = vpow.pop %v1471
      %v1473 = vsub.f32 %v1418, 1.0
      %v1474 = vsub.f32 %v1420, 1.0
      %v1475 = vsub.f32 %v1422, 1.0
      %v1476 = vsub.f32 %v1424, 1.0
      %v1477 = vsub.f32 %v1426, 1.0
      %v1478 = vsub.f32 %v1428, 1.0
      %v1479 = vsub.f32 %v1430, 1.0
      %v1480 = vsub.f32 %v1432, 1.0
      %v1481 = vsub.f32 %v1434, 1.0
      %v1482 = vsub.f32 %v1436, 1.0
      %v1483 = vsub.f32 %v1438, 1.0
      %v1484 = vsub.f32 %v1440, 1.0
      %v1485 = vsub.f32 %v1442, 1.0
      %v1486 = vsub.f32 %v1444, 1.0
      %v1487 = vsub.f32 %v1446, 1.0
      %v1488 = vsub.f32 %v1448, 1.0
      %v1489 = vsub.f32 %v1450, 1.0
      %v1490 = vsub.f32 %v1452, 1.0
      %v1491 = vsub.f32 %v1454, 1.0
      %v1492 = vsub.f32 %v1456, 1.0
      %v1493 = vsub.f32 %v1458, 1.0
      %v1494 = vsub.f32 %v1460, 1.0
      %v1495 = vsub.f32 %v1462, 1.0
      %v1496 = vsub.f32 %v1464, 1.0
      %v1497 = vsub.f32 %v1466, 1.0
      %v1498 = vsub.f32 %v1468, 1.0
      %v1499 = vsub.f32 %v1470, 1.0
      %v1500 = vsub.f32 %v1472, 1.0
      %v1501 = vmul.f32 %v1473, 1.6732632
      %v1502 = vmul.f32 %v1474, 1.6732632
      %v1503 = vmul.f32 %v1475, 1.6732632
      %v1504 = vmul.f32 %v1476, 1.6732632
      %v1505 = vmul.f32 %v1477, 1.6732632
      %v1506 = vmul.f32 %v1478, 1.6732632
      %v1507 = vmul.f32 %v1479, 1.6732632
      %v1508 = vmul.f32 %v1480, 1.6732632
      %v1509 = vmul.f32 %v1481, 1.6732632
      %v1510 = vmul.f32 %v1482, 1.6732632
      %v1511 = vmul.f32 %v1483, 1.6732632
      %v1512 = vmul.f32 %v1484, 1.6732632
      %v1513 = vmul.f32 %v1485, 1.6732632
      %v1514 = vmul.f32 %v1486, 1.6732632
      %v1515 = vmul.f32 %v1487, 1.6732632
      %v1516 = vmul.f32 %v1488, 1.6732632
      %v1517 = vmul.f32 %v1489, 1.6732632
      %v1518 = vmul.f32 %v1490, 1.6732632
      %v1519 = vmul.f32 %v1491, 1.6732632
      %v1520 = vmul.f32 %v1492, 1.6732632
      %v1521 = vmul.f32 %v1493, 1.6732632
      %v1522 = vmul.f32 %v1494, 1.6732632
      %v1523 = vmul.f32 %v1495, 1.6732632
      %v1524 = vmul.f32 %v1496, 1.6732632
      %v1525 = vmul.f32 %v1497, 1.6732632
      %v1526 = vmul.f32 %v1498, 1.6732632
      %v1527 = vmul.f32 %v1499, 1.6732632
      %v1528 = vmul.f32 %v1500, 1.6732632
      %v1529 = vsel %vm1361, %v1223, %v1501
      %v1530 = vsel %vm1362, %v1228, %v1502
      %v1531 = vsel %vm1363, %v1233, %v1503
      %v1532 = vsel %vm1364, %v1238, %v1504
      %v1533 = vsel %vm1365, %v1243, %v1505
      %v1534 = vsel %vm1366, %v1248, %v1506
      %v1535 = vsel %vm1367, %v1253, %v1507
      %v1536 = vsel %vm1368, %v1258, %v1508
      %v1537 = vsel %vm1369, %v1263, %v1509
      %v1538 = vsel %vm1370, %v1268, %v1510
      %v1539 = vsel %vm1371, %v1273, %v1511
      %v1540 = vsel %vm1372, %v1278, %v1512
      %v1541 = vsel %vm1373, %v1283, %v1513
      %v1542 = vsel %vm1374, %v1288, %v1514
      %v1543 = vsel %vm1375, %v1293, %v1515
      %v1544 = vsel %vm1376, %v1298, %v1516
      %v1545 = vsel %vm1377, %v1303, %v1517
      %v1546 = vsel %vm1378, %v1308, %v1518
      %v1547 = vsel %vm1379, %v1313, %v1519
      %v1548 = vsel %vm1380, %v1318, %v1520
      %v1549 = vsel %vm1381, %v1323, %v1521
      %v1550 = vsel %vm1382, %v1328, %v1522
      %v1551 = vsel %vm1383, %v1333, %v1523
      %v1552 = vsel %vm1384, %v1338, %v1524
      %v1553 = vsel %vm1385, %v1343, %v1525
      %v1554 = vsel %vm1386, %v1348, %v1526
      %v1555 = vsel %vm1387, %v1353, %v1527
      %v1556 = vsel %vm1388, %v1358, %v1528
      %v1557 = vmul.f32 %v1529, 1.050701
      %v1558 = vmul.f32 %v1530, 1.050701
      %v1559 = vmul.f32 %v1531, 1.050701
      %v1560 = vmul.f32 %v1532, 1.050701
      %v1561 = vmul.f32 %v1533, 1.050701
      %v1562 = vmul.f32 %v1534, 1.050701
      %v1563 = vmul.f32 %v1535, 1.050701
      %v1564 = vmul.f32 %v1536, 1.050701
      %v1565 = vmul.f32 %v1537, 1.050701
      %v1566 = vmul.f32 %v1538, 1.050701
      %v1567 = vmul.f32 %v1539, 1.050701
      %v1568 = vmul.f32 %v1540, 1.050701
      %v1569 = vmul.f32 %v1541, 1.050701
      %v1570 = vmul.f32 %v1542, 1.050701
      %v1571 = vmul.f32 %v1543, 1.050701
      %v1572 = vmul.f32 %v1544, 1.050701
      %v1573 = vmul.f32 %v1545, 1.050701
      %v1574 = vmul.f32 %v1546, 1.050701
      %v1575 = vmul.f32 %v1547, 1.050701
      %v1576 = vmul.f32 %v1548, 1.050701
      %v1577 = vmul.f32 %v1549, 1.050701
      %v1578 = vmul.f32 %v1550, 1.050701
      %v1579 = vmul.f32 %v1551, 1.050701
      %v1580 = vmul.f32 %v1552, 1.050701
      %v1581 = vmul.f32 %v1553, 1.050701
      %v1582 = vmul.f32 %v1554, 1.050701
      %v1583 = vmul.f32 %v1555, 1.050701
      %v1584 = vmul.f32 %v1556, 1.050701
      %v1585 = vld [vmem:[%s5] sm:$0xff]
      %v1586 = vld [vmem:[%s5 + $0x8] sm:$0xff]
      %v1587 = vld [vmem:[%s5 + $0x10] sm:$0x3f]
      %v1588 = vld [vmem:[%s5 + $0x18] sm:$0x3f]
      %vm1589 = vcmask 785408
      %v1591 = vsel %vm1589, %v1586, 0
      %v1594 = vsel %vm1589, %v1588, 0
      %1596 = vmatprep.subr.mxu0 0.0
      %1597 = vmatpush1.msra.mxu0 %v1557
      %1598 = vmatprep.subr.mxu0 0.0
      %1599 = vmatpush1.msra.mxu0 %v1558
      %1600 = vmatprep.subr.mxu0 0.0
      %1601 = vmatpush1.msra.mxu0 %v1559
      %1602 = vmatprep.subr.mxu0 0.0
      %1603 = vmatpush1.msra.mxu0 %v1560
      %1604 = vmatprep.subr.mxu0 0.0
      %1605 = vmatpush1.msra.mxu0 %v1561
      %1606 = vmatprep.subr.mxu0 0.0
      %1607 = vmatpush1.msra.mxu0 %v1562
      %1608 = vmatprep.subr.mxu0 0.0
      %1609 = vmatpush1.msra.mxu0 %v1563
      %1610 = vmatprep.subr.mxu0 0.0
      %1611 = vmatpush1.msra.mxu0 %v1564
      %1612 = vmatprep.subr.mxu0 0.0
      %1613 = vmatpush1.msra.mxu0 %v1565
      %1614 = vmatprep.subr.mxu0 0.0
      %1615 = vmatpush1.msra.mxu0 %v1566
      %1616 = vmatprep.subr.mxu0 0.0
      %1617 = vmatpush1.msra.mxu0 %v1567
      %1618 = vmatprep.subr.mxu0 0.0
      %1619 = vmatpush1.msra.mxu0 %v1568
      %1620 = vmatprep.subr.mxu0 0.0
      %1621 = vmatpush1.msra.mxu0 %v1569
      %1622 = vmatprep.subr.mxu0 0.0
      %1623 = vmatpush1.msra.mxu0 %v1570
      %1624 = vmatprep.subr.mxu0 0.0
      %1625 = vmatpush1.msra.mxu0 %v1571
      %1626 = vmatprep.subr.mxu0 0.0
      %1627 = vmatpush1.msra.mxu0 %v1572
      %1628 = vmatprep.subr.mxu0 0.0
      %1629 = vmatpush1.msra.mxu0 %v1573
      %1630 = vmatprep.subr.mxu0 0.0
      %1631 = vmatpush1.msra.mxu0 %v1574
      %1632 = vmatprep.subr.mxu0 0.0
      %1633 = vmatpush1.msra.mxu0 %v1575
      %1634 = vmatprep.subr.mxu0 0.0
      %1635 = vmatpush1.msra.mxu0 %v1576
      %1636 = vmatprep.subr.mxu0 0.0
      %1637 = vmatpush1.msra.mxu0 %v1577
      %1638 = vmatprep.subr.mxu0 0.0
      %1639 = vmatpush1.msra.mxu0 %v1578
      %1640 = vmatprep.subr.mxu0 0.0
      %1641 = vmatpush1.msra.mxu0 %v1579
      %1642 = vmatprep.subr.mxu0 0.0
      %1643 = vmatpush1.msra.mxu0 %v1580
      %1644 = vmatprep.subr.mxu0 0.0
      %1645 = vmatpush1.msra.mxu0 %v1581
      %1646 = vmatprep.subr.mxu0 0.0
      %1647 = vmatpush1.msra.mxu0 %v1582
      %1648 = vmatprep.subr.mxu0 0.0
      %1649 = vmatpush1.msra.mxu0 %v1583
      %1650 = vmatprep.subr.mxu0 0.0
      %1651 = vmatpush1.msra.mxu0 %v1584
      %1652 = vmatprep.subr.mxu0 0.0
      %1653 = vmatpush1.msra.mxu0 0.0
      %1654 = vmatprep.subr.mxu0 0.0
      %1655 = vmatpush1.msra.mxu0 0.0
      %1656 = vmatprep.subr.mxu0 0.0
      %1657 = vmatpush1.msra.mxu0 0.0
      %1658 = vmatprep.subr.mxu0 0.0
      %1659 = vmatpush1.msra.mxu0 0.0
      %1660 = vmatprep.mubr.f32.mxu0 %v1591
      %1661 = vmatmul.mubr.f32.gmra.mrb[0].mxu0 %v1585
      %v1662 = vpop.f32.mrb[0].mxu0
      %v1663 = vadd.f32 0.0, %v1662
      %v1664 = vpop.f32.mrb[0].mxu0
      %1665 = vmatprep.mubr.f32.mxu0 %v1594
      %1666 = vmatmul.mubr.f32.gmra.mrb[0].mxu0 %v1587
      %v1667 = vpop.f32.mrb[0].mxu0
      %v1668 = vadd.f32 0.0, %v1667
      %v1669 = vpop.f32.mrb[0].mxu0
      %1670 = vdwg.mxu0
      %1671 = vst [vmem:[%s251] sm:$0xff] %v1663
      %1672 = vst [vmem:[%s251 + $0x8] sm:$0x3f] %v1668
      %p1673 = scmp.lt.s32.totalorder %s17, 1
      %s1674 = scalar_select %p1673, %s17, 1
      %s1675 = smul.addr %s1674, 2
      %s1676 = smul.addr %s1675, 8
      %s1677 = scalar_lea.vmem %s6, %s1676
      // Predicated region
      $region45: #{tpu_custom_call.1} parent=43 // pred_check
        %p1678 = pneg %p166
      $region46: #{tpu_custom_call.1} parent=43 // pred_check_branch
        %1680 = sbr.rel (%p1678) target = $region48
      $region47: #{tpu_custom_call.1} parent=43 // pred_region
        _
      $region48: #{tpu_custom_call.1} parent=43 // pred_fallthru
        _
    $region44: #{tpu_custom_call.1} parent=5 // pred_fallthru
      _
    %p1681 = scmp.le.s32.totalorder 2, %s12
    // Predicated region
    $region49: #{tpu_custom_call.1} parent=5 // pred_check
      %p1682 = pneg %p1681
    $region50: #{tpu_custom_call.1} parent=5 // pred_check_branch
      %1684 = sbr.rel (%p1682) target = $region52
    $region51: #{tpu_custom_call.1} parent=5 // pred_region
      %s1685 = ssub.s32 %s12, 2
      // Predicated region
      $region53: #{tpu_custom_call.1} parent=51 // pred_check
        %p1686 = pneg %p172
      $region54: #{tpu_custom_call.1} parent=51 // pred_check_branch
        %1688 = sbr.rel (%p1686) target = $region56
      $region55: #{tpu_custom_call.1} parent=51 // pred_region
        %p1689 = scmp.lt.s32.totalorder %s18, 1
        %s1690 = scalar_select %p1689, %s18, 1
        %s1691 = smul.addr %s1690, 2
        %s1692 = smul.addr %s1691, 8
        %s1693 = scalar_lea.vmem %s6, %s1692
      $region56: #{tpu_custom_call.1} parent=51 // pred_fallthru
        _
    $region52: #{tpu_custom_call.1} parent=5 // pred_fallthru
      _
  $region6: #{tpu_custom_call.1} parent=0 // loop_footer
    %s16 = sadd.s32 1, %s12
  $region7: #{tpu_custom_call.1} parent=0 // loop_footer_branch
    %11 = sbr.rel target = $region3
  $region8: #{tpu_custom_call.1} parent=0 // loop_exit
    _

</llo_original>
